<compile_context>
chip_gen: v5e
topology: v5e:2x2
jax: 0.10.0
libtpu: 0.0.40
codegen_flags: <defaults>
</compile_context>

<pallas_src>
import functools

import jax
import jax.numpy as jnp
from jax import lax
from jax.experimental import pallas as pl
from jax.experimental.pallas import tpu as pltpu


def unet_output_kernel(x_ref, gamma_ref, beta_ref, w_ref, b_ref, gm_ref,
                       mask_ref, o_ref, *, C, Cp, H, W, cpg, eps, ew_dtype):
    HW = H * W
    x = x_ref[0].astype(jnp.float32)                        # (C, HW)

    # ---------------- GroupNorm(G, C) ----------------
    # Per-channel sums via lane reductions; the two (C,1) stat vectors are
    # group-reduced with a single (C,C)@(C,2) matmul against the resident
    # membership matrix.
    chan_sum = jnp.sum(x, axis=-1, keepdims=True)           # (C, 1)
    chan_sq = jnp.sum(x * x, axis=-1, keepdims=True)        # (C, 1)
    stats = jnp.concatenate([chan_sum, chan_sq], axis=1)    # (C, 2)
    grp = jnp.dot(gm_ref[...], stats,
                  preferred_element_type=jnp.float32)       # (C, 2)

    inv_n = 1.0 / (cpg * HW)
    mean = grp[:, 0:1] * inv_n
    # E[x^2]-E[x]^2 in f32; acceptable for normalized UNet activations.
    var = grp[:, 1:2] * inv_n - mean * mean
    inv = lax.rsqrt(var + eps)
    # Fold normalization + affine into a single per-channel scale/shift.
    s = inv * gamma_ref[...]                                # (C, 1) f32
    t = beta_ref[...] - mean * s                            # (C, 1) f32

    # ---------------- normalize + SiLU (elementwise dtype) ----------------
    xe = x.astype(ew_dtype)
    xn = xe * s.astype(ew_dtype) + t.astype(ew_dtype)       # (C, HW)
    half = jnp.asarray(0.5, dtype=ew_dtype)
    # silu(x) = x * sigmoid(x) = x * (0.5*tanh(0.5*x) + 0.5)  -- one EUP op.
    a = xn * (half * jnp.tanh(xn * half) + half)

    # ---------------- Conv2d 3x3, padding=1 ----------------
    # One big bf16 matmul for all 9 taps, then shift/mask the (Cp, HW) tap
    # slabs on the output side and accumulate in f32.
    big = jnp.dot(w_ref[...], a.astype(jnp.bfloat16),
                  preferred_element_type=jnp.float32)       # (9*Cp, HW)

    # Centre tap (kh=kw=1 -> tap index 4) needs no shift/mask: seed the
    # accumulator with it plus the bias.
    acc = big[4 * Cp:5 * Cp, :] + b_ref[...]                # (Cp, HW)

    k = 0
    for kh in range(3):
        for kw in range(3):
            if kh == 1 and kw == 1:
                continue
            dh, dw = kh - 1, kw - 1
            off = dh * W + dw
            tap = kh * 3 + kw
            y = big[tap * Cp:(tap + 1) * Cp, :]             # 8-aligned slice
            # y[:, p] <- big_tap[:, p + off]  (wrap-around zeroed by mask)
            y = pltpu.roll(y, shift=(-off) % HW, axis=1)
            acc = acc + y * mask_ref[k:k + 1, :]            # (1,HW) broadcast
            k += 1

    o_ref[0] = acc.astype(o_ref.dtype)


def unet_output_layer(x, gamma, beta, weight, bias, *, groups=32, eps=1e-5,
                      elementwise_dtype=jnp.bfloat16):
    """x: (N, C, H, W) NCHW.  weight: (Cout, C, 3, 3) OIHW.  Returns NCHW.

    elementwise_dtype: bf16 (default) doubles VPU/EUP throughput on v6e/v7x;
    pass jnp.float32 on v5e (no bf16 VPU/EUP) or for tighter accuracy.
    """
    N, C, H, W = x.shape
    Cout = weight.shape[0]
    HW = H * W
    assert C % groups == 0
    cpg = C // groups

    # Pad Cout up to a multiple of 8 so every per-tap weight/result slab is
    # sublane-tile aligned inside the kernel.
    Cp = max(8, ((Cout + 7) // 8) * 8)

    x_flat = x.reshape(N, C, HW)

    # (Cout, C, 3, 3) -> (3, 3, Cout, C) -> pad Cout -> (9*Cp, C), bf16 for MXU.
    w_taps = jnp.transpose(weight, (2, 3, 0, 1))
    w_taps = jnp.pad(w_taps, ((0, 0), (0, 0), (0, Cp - Cout), (0, 0)))
    w_taps = w_taps.reshape(9 * Cp, C).astype(jnp.bfloat16)

    gamma2 = gamma.reshape(C, 1).astype(jnp.float32)
    beta2 = beta.reshape(C, 1).astype(jnp.float32)
    bias2 = jnp.pad(bias.astype(jnp.float32), (0, Cp - Cout)).reshape(Cp, 1)

    # Grid-invariant constants, built once host-side and kept VMEM-resident:
    #  * group-membership matrix for the GN group reduce
    cid = jnp.arange(C) // cpg
    gm = (cid[:, None] == cid[None, :]).astype(jnp.float32)         # (C, C)
    #  * boundary-validity masks for the 8 shifted conv taps
    pos = jnp.arange(HW)
    row, col = pos // W, pos % W
    mask_rows = []
    for kh in range(3):
        for kw in range(3):
            if kh == 1 and kw == 1:
                continue
            dh, dw = kh - 1, kw - 1
            valid = ((row + dh >= 0) & (row + dh < H) &
                     (col + dw >= 0) & (col + dw < W))
            mask_rows.append(valid.astype(jnp.float32))
    masks = jnp.stack(mask_rows)                                     # (8, HW)

    kernel = functools.partial(unet_output_kernel, C=C, Cp=Cp, H=H, W=W,
                               cpg=cpg, eps=eps, ew_dtype=elementwise_dtype)

    # Explicit VMEM budget: double-buffered I/O blocks + resident constants +
    # headroom for the in-kernel intermediates (x f32, xn/a, 9-tap result,
    # accumulator).  Cap at 7/8 of physical VMEM (56 MiB on v7x, 112 MiB on
    # v5e/v6e) to leave compiler scratch headroom.
    io_itemsize = jnp.dtype(x.dtype).itemsize
    ew_itemsize = jnp.dtype(elementwise_dtype).itemsize
    resident = 9 * Cp * C * 2 + C * C * 4 + 8 * HW * 4 + (2 * C + Cp) * 4
    per_step = (2 * C * HW * io_itemsize + 2 * Cp * HW * io_itemsize
                + C * HW * 4 + C * HW * ew_itemsize
                + 9 * Cp * HW * 4 + Cp * HW * 4)
    try:
        vmem_cap = int(pltpu.get_tpu_info().vmem_capacity_bytes)
    except Exception:
        vmem_cap = 128 << 20
    vmem_bytes = int(min(max(int(1.25 * (resident + per_step)), 4 << 20),
                         (vmem_cap * 7) // 8))

    out_flat = pl.pallas_call(
        kernel,
        out_shape=jax.ShapeDtypeStruct((N, Cp, HW), x.dtype),
        grid_spec=pltpu.PrefetchScalarGridSpec(
            num_scalar_prefetch=0,
            grid=(N,),
            in_specs=[
                pl.BlockSpec((1, C, HW), lambda n: (n, 0, 0)),     # x
                pl.BlockSpec((C, 1), lambda n: (0, 0)),            # gamma
                pl.BlockSpec((C, 1), lambda n: (0, 0)),            # beta
                pl.BlockSpec((9 * Cp, C), lambda n: (0, 0)),       # conv weights
                pl.BlockSpec((Cp, 1), lambda n: (0, 0)),           # conv bias
                pl.BlockSpec((C, C), lambda n: (0, 0)),            # group matrix
                pl.BlockSpec((8, HW), lambda n: (0, 0)),           # tap masks
            ],
            out_specs=pl.BlockSpec((1, Cp, HW), lambda n: (n, 0, 0)),
        ),
        compiler_params=pltpu.CompilerParams(
            dimension_semantics=("parallel",),
            vmem_limit_bytes=vmem_bytes),
    )(x_flat, gamma2, beta2, w_taps, bias2, gm, masks)

    return out_flat[:, :Cout, :].reshape(N, Cout, H, W)


def reference(x, gamma, beta, weight, bias, *, groups=32, eps=1e-5):
    N, C, H, W = x.shape
    Cout = weight.shape[0]
    xg = x.reshape(N, groups, C // groups, H, W)
    mean = xg.mean(axis=(2, 3, 4), keepdims=True)
    var = ((xg - mean) ** 2).mean(axis=(2, 3, 4), keepdims=True)
    xn = ((xg - mean) / jnp.sqrt(var + eps)).reshape(N, C, H, W)
    xn = xn * gamma.reshape(1, C, 1, 1) + beta.reshape(1, C, 1, 1)
    a = xn * jax.nn.sigmoid(xn)
    out = lax.conv_general_dilated(
        a, weight, window_strides=(1, 1), padding=((1, 1), (1, 1)),
        dimension_numbers=('NCHW', 'OIHW', 'NCHW'))
    return out + bias.reshape(1, Cout, 1, 1)


if __name__ == "__main__":
    N, C, Cout, H, W = 2, 64, 4, 16, 16   # C must be divisible by 32 groups

    key = jax.random.PRNGKey(0)
    kx, kw, kb, kg, kbe = jax.random.split(key, 5)
    x = jax.random.normal(kx, (N, C, H, W), dtype=jnp.float32)
    weight = jax.random.normal(kw, (Cout, C, 3, 3), dtype=jnp.float32) * 0.05
    bias = jax.random.normal(kb, (Cout,), dtype=jnp.float32) * 0.1
    gamma = 1.0 + 0.1 * jax.random.normal(kg, (C,), dtype=jnp.float32)
    beta = 0.1 * jax.random.normal(kbe, (C,), dtype=jnp.float32)

    out = unet_output_layer(x, gamma, beta, weight, bias)
    out = jax.block_until_ready(out)

    ref = jax.block_until_ready(reference(x, gamma, beta, weight, bias))
    assert out.shape == (N, Cout, H, W)
    # bf16 normalize/SiLU + bf16 MXU inputs vs the f32 reference.
    assert jnp.allclose(out, ref, rtol=3e-2, atol=3e-2), (
        float(jnp.max(jnp.abs(out - ref))))

    print("KERNEL_OK")
</pallas_src>

<mosaic_0001>
module attributes {stable_mosaic.version = 11 : i64} {
  func.func @unet_output_kernel(%arg0: i32, %arg1: memref<1x64x256xf32, #tpu.memory_space<vmem>>, %arg2: memref<64x1xf32, #tpu.memory_space<vmem>>, %arg3: memref<64x1xf32, #tpu.memory_space<vmem>>, %arg4: memref<72x64xbf16, #tpu.memory_space<vmem>>, %arg5: memref<8x1xf32, #tpu.memory_space<vmem>>, %arg6: memref<64x64xf32, #tpu.memory_space<vmem>>, %arg7: memref<8x256xf32, #tpu.memory_space<vmem>>, %arg8: memref<1x8x256xf32, #tpu.memory_space<vmem>>) attributes {dimension_semantics = [#tpu.dimension_semantics<parallel>], iteration_bounds = array<i64: 2>, scalar_prefetch = 0 : i64, scratch_operands = 0 : i64, tpu.core_type = #tpu.core_type<tc>, window_params = [{transform_indices = @transform_0, window_bounds = array<i64: 1, 64, 256>}, {pipeline_mode = #tpu.pipeline_mode<synchronous>, transform_indices = @transform_1, window_bounds = array<i64: 64, 1>}, {pipeline_mode = #tpu.pipeline_mode<synchronous>, transform_indices = @transform_2, window_bounds = array<i64: 64, 1>}, {pipeline_mode = #tpu.pipeline_mode<synchronous>, transform_indices = @transform_3, window_bounds = array<i64: 72, 64>}, {pipeline_mode = #tpu.pipeline_mode<synchronous>, transform_indices = @transform_4, window_bounds = array<i64: 8, 1>}, {pipeline_mode = #tpu.pipeline_mode<synchronous>, transform_indices = @transform_5, window_bounds = array<i64: 64, 64>}, {pipeline_mode = #tpu.pipeline_mode<synchronous>, transform_indices = @transform_6, window_bounds = array<i64: 8, 256>}, {transform_indices = @transform_7, window_bounds = array<i64: 1, 8, 256>}]} {
    %c0 = arith.constant 0 : index
    %c0_0 = arith.constant 0 : index
    %c0_1 = arith.constant 0 : index
    %0 = vector.load %arg1[%c0, %c0_0, %c0_1] : memref<1x64x256xf32, #tpu.memory_space<vmem>>, vector<1x64x256xf32>
    %1 = vector.shape_cast %0 : vector<1x64x256xf32> to vector<64x256xf32>
    %cst = arith.constant dense<0.000000e+00> : vector<64xf32>
    %2 = vector.multi_reduction <add>, %1, %cst [1] : vector<64x256xf32> to vector<64xf32>
    %3 = vector.shape_cast %2 : vector<64xf32> to vector<64x1xf32>
    %4 = arith.mulf %1, %1 : vector<64x256xf32>
    %cst_2 = arith.constant dense<0.000000e+00> : vector<64xf32>
    %5 = vector.multi_reduction <add>, %4, %cst_2 [1] : vector<64x256xf32> to vector<64xf32>
    %6 = vector.shape_cast %5 : vector<64xf32> to vector<64x1xf32>
    %7 = tpu.concatenate %3, %6 in 1 : vector<64x1xf32>, vector<64x1xf32> -> vector<64x2xf32>
    %c0_3 = arith.constant 0 : index
    %c0_4 = arith.constant 0 : index
    %8 = vector.load %arg6[%c0_3, %c0_4] : memref<64x64xf32, #tpu.memory_space<vmem>>, vector<64x64xf32>
    %cst_5 = arith.constant dense<0.000000e+00> : vector<64x2xf32>
    %9 = tpu.matmul %8, %7, %cst_5 {dimension_numbers = #tpu.dot_dimension_numbers<[1], [0], [0], [1], [0, 0, 1, 1], [], []>} : vector<64x64xf32>, vector<64x2xf32>, vector<64x2xf32> -> vector<64x2xf32>
    %10 = vector.extract_strided_slice %9 {offsets = [0, 0], sizes = [64, 1], strides = [1, 1]} : vector<64x2xf32> to vector<64x1xf32>
    %cst_6 = arith.constant 0.001953125 : f32
    %11 = vector.broadcast %cst_6 : f32 to vector<64x1xf32>
    %12 = arith.mulf %10, %11 : vector<64x1xf32>
    %13 = vector.extract_strided_slice %9 {offsets = [0, 1], sizes = [64, 1], strides = [1, 1]} : vector<64x2xf32> to vector<64x1xf32>
    %cst_7 = arith.constant 0.001953125 : f32
    %14 = vector.broadcast %cst_7 : f32 to vector<64x1xf32>
    %15 = arith.mulf %13, %14 : vector<64x1xf32>
    %16 = arith.mulf %12, %12 : vector<64x1xf32>
    %17 = arith.subf %15, %16 : vector<64x1xf32>
    %cst_8 = arith.constant 9.99999974E-6 : f32
    %18 = vector.broadcast %cst_8 : f32 to vector<64x1xf32>
    %19 = arith.addf %17, %18 : vector<64x1xf32>
    %20 = math.rsqrt %19 : vector<64x1xf32>
    %c0_9 = arith.constant 0 : index
    %c0_10 = arith.constant 0 : index
    %21 = vector.load %arg2[%c0_9, %c0_10] : memref<64x1xf32, #tpu.memory_space<vmem>>, vector<64x1xf32>
    %22 = arith.mulf %20, %21 : vector<64x1xf32>
    %c0_11 = arith.constant 0 : index
    %c0_12 = arith.constant 0 : index
    %23 = vector.load %arg3[%c0_11, %c0_12] : memref<64x1xf32, #tpu.memory_space<vmem>>, vector<64x1xf32>
    %24 = arith.mulf %12, %22 : vector<64x1xf32>
    %25 = arith.subf %23, %24 : vector<64x1xf32>
    %26 = arith.truncf %1 : vector<64x256xf32> to vector<64x256xbf16>
    %27 = arith.truncf %22 : vector<64x1xf32> to vector<64x1xbf16>
    %28 = vector.broadcast %27 : vector<64x1xbf16> to vector<64x256xbf16>
    %29 = arith.mulf %26, %28 : vector<64x256xbf16>
    %30 = arith.truncf %25 : vector<64x1xf32> to vector<64x1xbf16>
    %31 = vector.broadcast %30 : vector<64x1xbf16> to vector<64x256xbf16>
    %32 = arith.addf %29, %31 : vector<64x256xbf16>
    %cst_13 = arith.constant 5.000000e-01 : bf16
    %33 = vector.broadcast %cst_13 : bf16 to vector<64x256xbf16>
    %34 = arith.mulf %32, %33 : vector<64x256xbf16>
    %35 = math.tanh %34 : vector<64x256xbf16>
    %cst_14 = arith.constant 5.000000e-01 : bf16
    %36 = vector.broadcast %cst_14 : bf16 to vector<64x256xbf16>
    %37 = arith.mulf %36, %35 : vector<64x256xbf16>
    %cst_15 = arith.constant 5.000000e-01 : bf16
    %38 = vector.broadcast %cst_15 : bf16 to vector<64x256xbf16>
    %39 = arith.addf %37, %38 : vector<64x256xbf16>
    %40 = arith.mulf %32, %39 : vector<64x256xbf16>
    %c0_16 = arith.constant 0 : index
    %c0_17 = arith.constant 0 : index
    %41 = vector.load %arg4[%c0_16, %c0_17] : memref<72x64xbf16, #tpu.memory_space<vmem>>, vector<72x64xbf16>
    %cst_18 = arith.constant dense<0.000000e+00> : vector<72x256xf32>
    %42 = tpu.matmul %41, %40, %cst_18 {dimension_numbers = #tpu.dot_dimension_numbers<[1], [0], [0], [1], [0, 0, 1, 1], [], []>} : vector<72x64xbf16>, vector<64x256xbf16>, vector<72x256xf32> -> vector<72x256xf32>
    %43 = vector.extract_strided_slice %42 {offsets = [32, 0], sizes = [8, 256], strides = [1, 1]} : vector<72x256xf32> to vector<8x256xf32>
    %c0_19 = arith.constant 0 : index
    %c0_20 = arith.constant 0 : index
    %44 = vector.load %arg5[%c0_19, %c0_20] : memref<8x1xf32, #tpu.memory_space<vmem>>, vector<8x1xf32>
    %45 = vector.broadcast %44 : vector<8x1xf32> to vector<8x256xf32>
    %46 = arith.addf %43, %45 : vector<8x256xf32>
    %47 = vector.extract_strided_slice %42 {offsets = [0, 0], sizes = [8, 256], strides = [1, 1]} : vector<72x256xf32> to vector<8x256xf32>
    %c17_i32 = arith.constant 17 : i32
    %48 = tpu.dynamic_rotate %47 by %c17_i32 dim 1 : vector<8x256xf32>, i32 -> vector<8x256xf32>
    %c0_21 = arith.constant 0 : index
    %c0_22 = arith.constant 0 : index
    %49 = vector.load %arg7[%c0_21, %c0_22] : memref<8x256xf32, #tpu.memory_space<vmem>>, vector<1x256xf32>
    %50 = vector.broadcast %49 : vector<1x256xf32> to vector<8x256xf32>
    %51 = arith.mulf %48, %50 : vector<8x256xf32>
    %52 = arith.addf %46, %51 : vector<8x256xf32>
    %53 = vector.extract_strided_slice %42 {offsets = [8, 0], sizes = [8, 256], strides = [1, 1]} : vector<72x256xf32> to vector<8x256xf32>
    %c16_i32 = arith.constant 16 : i32
    %54 = tpu.dynamic_rotate %53 by %c16_i32 dim 1 : vector<8x256xf32>, i32 -> vector<8x256xf32>
    %c1 = arith.constant 1 : index
    %c0_23 = arith.constant 0 : index
    %55 = vector.load %arg7[%c1, %c0_23] : memref<8x256xf32, #tpu.memory_space<vmem>>, vector<1x256xf32>
    %56 = vector.broadcast %55 : vector<1x256xf32> to vector<8x256xf32>
    %57 = arith.mulf %54, %56 : vector<8x256xf32>
    %58 = arith.addf %52, %57 : vector<8x256xf32>
    %59 = vector.extract_strided_slice %42 {offsets = [16, 0], sizes = [8, 256], strides = [1, 1]} : vector<72x256xf32> to vector<8x256xf32>
    %c15_i32 = arith.constant 15 : i32
    %60 = tpu.dynamic_rotate %59 by %c15_i32 dim 1 : vector<8x256xf32>, i32 -> vector<8x256xf32>
    %c2 = arith.constant 2 : index
    %c0_24 = arith.constant 0 : index
    %61 = vector.load %arg7[%c2, %c0_24] : memref<8x256xf32, #tpu.memory_space<vmem>>, vector<1x256xf32>
    %62 = vector.broadcast %61 : vector<1x256xf32> to vector<8x256xf32>
    %63 = arith.mulf %60, %62 : vector<8x256xf32>
    %64 = arith.addf %58, %63 : vector<8x256xf32>
    %65 = vector.extract_strided_slice %42 {offsets = [24, 0], sizes = [8, 256], strides = [1, 1]} : vector<72x256xf32> to vector<8x256xf32>
    %c1_i32 = arith.constant 1 : i32
    %66 = tpu.dynamic_rotate %65 by %c1_i32 dim 1 : vector<8x256xf32>, i32 -> vector<8x256xf32>
    %c3 = arith.constant 3 : index
    %c0_25 = arith.constant 0 : index
    %67 = vector.load %arg7[%c3, %c0_25] : memref<8x256xf32, #tpu.memory_space<vmem>>, vector<1x256xf32>
    %68 = vector.broadcast %67 : vector<1x256xf32> to vector<8x256xf32>
    %69 = arith.mulf %66, %68 : vector<8x256xf32>
    %70 = arith.addf %64, %69 : vector<8x256xf32>
    %71 = vector.extract_strided_slice %42 {offsets = [40, 0], sizes = [8, 256], strides = [1, 1]} : vector<72x256xf32> to vector<8x256xf32>
    %c255_i32 = arith.constant 255 : i32
    %72 = tpu.dynamic_rotate %71 by %c255_i32 dim 1 : vector<8x256xf32>, i32 -> vector<8x256xf32>
    %c4 = arith.constant 4 : index
    %c0_26 = arith.constant 0 : index
    %73 = vector.load %arg7[%c4, %c0_26] : memref<8x256xf32, #tpu.memory_space<vmem>>, vector<1x256xf32>
    %74 = vector.broadcast %73 : vector<1x256xf32> to vector<8x256xf32>
    %75 = arith.mulf %72, %74 : vector<8x256xf32>
    %76 = arith.addf %70, %75 : vector<8x256xf32>
    %77 = vector.extract_strided_slice %42 {offsets = [48, 0], sizes = [8, 256], strides = [1, 1]} : vector<72x256xf32> to vector<8x256xf32>
    %c241_i32 = arith.constant 241 : i32
    %78 = tpu.dynamic_rotate %77 by %c241_i32 dim 1 : vector<8x256xf32>, i32 -> vector<8x256xf32>
    %c5 = arith.constant 5 : index
    %c0_27 = arith.constant 0 : index
    %79 = vector.load %arg7[%c5, %c0_27] : memref<8x256xf32, #tpu.memory_space<vmem>>, vector<1x256xf32>
    %80 = vector.broadcast %79 : vector<1x256xf32> to vector<8x256xf32>
    %81 = arith.mulf %78, %80 : vector<8x256xf32>
    %82 = arith.addf %76, %81 : vector<8x256xf32>
    %83 = vector.extract_strided_slice %42 {offsets = [56, 0], sizes = [8, 256], strides = [1, 1]} : vector<72x256xf32> to vector<8x256xf32>
    %c240_i32 = arith.constant 240 : i32
    %84 = tpu.dynamic_rotate %83 by %c240_i32 dim 1 : vector<8x256xf32>, i32 -> vector<8x256xf32>
    %c6 = arith.constant 6 : index
    %c0_28 = arith.constant 0 : index
    %85 = vector.load %arg7[%c6, %c0_28] : memref<8x256xf32, #tpu.memory_space<vmem>>, vector<1x256xf32>
    %86 = vector.broadcast %85 : vector<1x256xf32> to vector<8x256xf32>
    %87 = arith.mulf %84, %86 : vector<8x256xf32>
    %88 = arith.addf %82, %87 : vector<8x256xf32>
    %89 = vector.extract_strided_slice %42 {offsets = [64, 0], sizes = [8, 256], strides = [1, 1]} : vector<72x256xf32> to vector<8x256xf32>
    %c239_i32 = arith.constant 239 : i32
    %90 = tpu.dynamic_rotate %89 by %c239_i32 dim 1 : vector<8x256xf32>, i32 -> vector<8x256xf32>
    %c7 = arith.constant 7 : index
    %c0_29 = arith.constant 0 : index
    %91 = vector.load %arg7[%c7, %c0_29] : memref<8x256xf32, #tpu.memory_space<vmem>>, vector<1x256xf32>
    %92 = vector.broadcast %91 : vector<1x256xf32> to vector<8x256xf32>
    %93 = arith.mulf %90, %92 : vector<8x256xf32>
    %94 = arith.addf %88, %93 : vector<8x256xf32>
    %c0_30 = arith.constant 0 : index
    %c0_31 = arith.constant 0 : index
    %c0_32 = arith.constant 0 : index
    %95 = vector.load %arg8[%c0_30, %c0_31, %c0_32] : memref<1x8x256xf32, #tpu.memory_space<vmem>>, vector<1x8x256xf32>
    %96 = vector.shape_cast %95 : vector<1x8x256xf32> to vector<8x256xf32>
    %97 = vector.shape_cast %94 : vector<8x256xf32> to vector<1x8x256xf32>
    tpu.vector_store %arg8[%c0_30, %c0_31, %c0_32], %97 {strides = array<i32>} : memref<1x8x256xf32, #tpu.memory_space<vmem>>, vector<1x8x256xf32>,
    return
  }
  func.func @transform_0(%arg0: i32) -> (i32, i32, i32) {
    %c0_i32 = arith.constant 0 : i32
    %c0_i32_0 = arith.constant 0 : i32
    %c0_i32_1 = arith.constant 0 : i32
    return %arg0, %c0_i32, %c0_i32_0 : i32, i32, i32
  }
  func.func @transform_1(%arg0: i32) -> (i32, i32) {
    %c0_i32 = arith.constant 0 : i32
    %c0_i32_0 = arith.constant 0 : i32
    %c0_i32_1 = arith.constant 0 : i32
    return %c0_i32, %c0_i32_0 : i32, i32
  }
  func.func @transform_2(%arg0: i32) -> (i32, i32) {
    %c0_i32 = arith.constant 0 : i32
    %c0_i32_0 = arith.constant 0 : i32
    %c0_i32_1 = arith.constant 0 : i32
    return %c0_i32, %c0_i32_0 : i32, i32
  }
  func.func @transform_3(%arg0: i32) -> (i32, i32) {
    %c0_i32 = arith.constant 0 : i32
    %c0_i32_0 = arith.constant 0 : i32
    %c0_i32_1 = arith.constant 0 : i32
    return %c0_i32, %c0_i32_0 : i32, i32
  }
  func.func @transform_4(%arg0: i32) -> (i32, i32) {
    %c0_i32 = arith.constant 0 : i32
    %c0_i32_0 = arith.constant 0 : i32
    %c0_i32_1 = arith.constant 0 : i32
    return %c0_i32, %c0_i32_0 : i32, i32
  }
  func.func @transform_5(%arg0: i32) -> (i32, i32) {
    %c0_i32 = arith.constant 0 : i32
    %c0_i32_0 = arith.constant 0 : i32
    %c0_i32_1 = arith.constant 0 : i32
    return %c0_i32, %c0_i32_0 : i32, i32
  }
  func.func @transform_6(%arg0: i32) -> (i32, i32) {
    %c0_i32 = arith.constant 0 : i32
    %c0_i32_0 = arith.constant 0 : i32
    %c0_i32_1 = arith.constant 0 : i32
    return %c0_i32, %c0_i32_0 : i32, i32
  }
  func.func @transform_7(%arg0: i32) -> (i32, i32, i32) {
    %c0_i32 = arith.constant 0 : i32
    %c0_i32_0 = arith.constant 0 : i32
    %c0_i32_1 = arith.constant 0 : i32
    return %arg0, %c0_i32, %c0_i32_0 : i32, i32, i32
  }
}

</mosaic_0001>

<llo_original>
// kernel: tpu_custom_call.1
$region0: #{tpu_custom_call.1}
  #allocation0 [shape = 'u32[]', space=smem, size = 0x4, offset = 0x4, fixed_abs, tag = 'smem constant byte address 0x4 - core index']
  #allocation1 [shape = 'u32[72,128]{1,0:T(1,128)}', space=vmem, size = 0x9000, scoped, tag = 'internal scratch']
  %s0 = inlined_call_operand.hbm [shape: f32[2,64,256], index: 0, kind: input, shape index: {}]
  %s1 = inlined_call_operand.vmem [shape: f32[64,1], index: 1, kind: input, shape index: {}]
  %s2 = inlined_call_operand.vmem [shape: f32[64,1], index: 2, kind: input, shape index: {}]
  %s3 = inlined_call_operand.vmem [shape: bf16[72,64], index: 3, kind: input, shape index: {}]
  %s4 = inlined_call_operand.vmem [shape: f32[8,1], index: 4, kind: input, shape index: {}]
  %s5 = inlined_call_operand.vmem [shape: f32[64,64], index: 5, kind: input, shape index: {}]
  %s6 = inlined_call_operand.vmem [shape: f32[8,256], index: 6, kind: input, shape index: {}]
  %s7 = inlined_call_operand.hbm [shape: f32[2,8,256], index: 7, kind: output, shape index: {}]
  %s8 = sld [smem:[#allocation0]]
  $region65: #{tpu_custom_call.1} parent=0
    _
  %s10 = ssub.s32 1, %s8
  %s11 = scalar_select 0, %s10, %s8
  $region1: #{tpu_custom_call.1} parent=0
    #allocation2 [shape = 'u8[131072]{0}', space=vmem, size = 0x20000, scoped, tag = 'input window, operand 0']
    #allocation3 [shape = 's32[2]{0}', space=sflag, size = 0x8, scoped, tag = 'scoped memory for tpu_custom_call.1']
    #allocation4 [shape = 's32[2]{0}', space=sflag, size = 0x8, scoped, tag = 'scoped memory for tpu_custom_call.1']
    #allocation5 [shape = 'u8[16384]{0}', space=vmem, size = 0x4000, scoped, tag = 'output window, operand 0']
    %12 = vsyncpa [#allocation3], 0
    %s13 = scalar_lea.sflag [#allocation3], 1
    %14 = vsyncpa %s13, 0
    %15 = vsyncpa [#allocation4], 0
    %s16 = scalar_lea.sflag [#allocation4], 1
    %17 = vsyncpa %s16, 0
    loop: start=0, step=1, limit=4
    $region2: #{tpu_custom_call.1} parent=1 // loop_pre_header
      _
    $region3: #{tpu_custom_call.1} parent=1 // loop_header
      %s19 = sphi 0, %s23
      %p20 = scmp.ge.s32.totalorder %s19, 4
      %s29 = sphi 0, %s31
      %s32 = sphi 0, %s29
      %s33 = sphi 0, %s32
      %s49 = sphi 0, %s33
      %s53 = sphi 0, %s53
      %s55 = sphi 0, %s53
      %s56 = sphi 0, %s55
      %s70 = sphi 0, %s56
      %s74 = sphi 0, %s74
      %s76 = sphi 0, %s74
      %s77 = sphi 0, %s76
      %s91 = sphi 0, %s77
      %s95 = sphi 0, %s95
      %s97 = sphi 0, %s95
      %s98 = sphi 0, %s97
      %s112 = sphi 0, %s98
      %s116 = sphi 0, %s116
      %s118 = sphi 0, %s116
      %s119 = sphi 0, %s118
      %s133 = sphi 0, %s119
      %s137 = sphi 0, %s137
      %s139 = sphi 0, %s137
      %s140 = sphi 0, %s139
      %s154 = sphi 0, %s140
      %s158 = sphi 0, %s158
      %s160 = sphi 0, %s158
      %s161 = sphi 0, %s160
      %s175 = sphi 0, %s161
      %s181 = sphi 0, %s183
      %s184 = sphi 0, %s181
      %s185 = sphi 0, %s184
      %s201 = sphi 0, %s185
    $region4: #{tpu_custom_call.1} parent=1 // loop_header_branch
      %22 = sbr.rel (%p20) target = $region8
    $region5: #{tpu_custom_call.1} parent=1 // loop_body
      %s24 = ssub.s32 %s19, 1
      %s25 = ssub.s32 %s19, 2
      %s26 = sadd.s32 %s19, 1
      %s27 = ssub.s32 %s19, %s26
      %p28 = scmp.eq.s32.totalorder %s27, 0
      %s30 = sadd.s32 %s29, 1
      %s31 = scalar_select %p28, %s29, %s30
      %p34 = pneg %p28
      %p35 = scmp.eq.s32.totalorder %s19, 1
      %p36 = por %p34, %p35
      %p37 = scmp.ne.s32.totalorder %s29, %s32
      %p38 = scmp.eq.s32.totalorder %s19, 0
      %p39 = por %p37, %p38
      %p40 = scmp.ne.s32.totalorder %s29, %s32
      %p41 = scmp.eq.s32.totalorder %s24, 1
      %p42 = por %p40, %p41
      %p43 = scmp.ne.s32.totalorder %s32, %s33
      %p44 = scmp.eq.s32.totalorder %s24, 0
      %p45 = por %p43, %p44
      %p46 = scmp.ne.s32.totalorder %s32, %s33
      %p47 = scmp.eq.s32.totalorder %s25, 1
      %p48 = por %p46, %p47
      %p50 = scmp.ne.s32.totalorder %s33, %s49
      %p51 = scmp.eq.s32.totalorder %s25, 0
      %p52 = por %p50, %p51
      %s54 = sadd.s32 %s53, 1
      %p57 = scmp.eq.s32.totalorder %s19, 1
      %p58 = scmp.ne.s32.totalorder %s53, %s55
      %p59 = scmp.eq.s32.totalorder %s19, 0
      %p60 = por %p58, %p59
      %p61 = scmp.ne.s32.totalorder %s53, %s55
      %p62 = scmp.eq.s32.totalorder %s24, 1
      %p63 = por %p61, %p62
      %p64 = scmp.ne.s32.totalorder %s55, %s56
      %p65 = scmp.eq.s32.totalorder %s24, 0
      %p66 = por %p64, %p65
      %p67 = scmp.ne.s32.totalorder %s55, %s56
      %p68 = scmp.eq.s32.totalorder %s25, 1
      %p69 = por %p67, %p68
      %p71 = scmp.ne.s32.totalorder %s56, %s70
      %p72 = scmp.eq.s32.totalorder %s25, 0
      %p73 = por %p71, %p72
      %s75 = sadd.s32 %s74, 1
      %p78 = scmp.eq.s32.totalorder %s19, 1
      %p79 = scmp.ne.s32.totalorder %s74, %s76
      %p80 = scmp.eq.s32.totalorder %s19, 0
      %p81 = por %p79, %p80
      %p82 = scmp.ne.s32.totalorder %s74, %s76
      %p83 = scmp.eq.s32.totalorder %s24, 1
      %p84 = por %p82, %p83
      %p85 = scmp.ne.s32.totalorder %s76, %s77
      %p86 = scmp.eq.s32.totalorder %s24, 0
      %p87 = por %p85, %p86
      %p88 = scmp.ne.s32.totalorder %s76, %s77
      %p89 = scmp.eq.s32.totalorder %s25, 1
      %p90 = por %p88, %p89
      %p92 = scmp.ne.s32.totalorder %s77, %s91
      %p93 = scmp.eq.s32.totalorder %s25, 0
      %p94 = por %p92, %p93
      %s96 = sadd.s32 %s95, 1
      %p99 = scmp.eq.s32.totalorder %s19, 1
      %p100 = scmp.ne.s32.totalorder %s95, %s97
      %p101 = scmp.eq.s32.totalorder %s19, 0
      %p102 = por %p100, %p101
      %p103 = scmp.ne.s32.totalorder %s95, %s97
      %p104 = scmp.eq.s32.totalorder %s24, 1
      %p105 = por %p103, %p104
      %p106 = scmp.ne.s32.totalorder %s97, %s98
      %p107 = scmp.eq.s32.totalorder %s24, 0
      %p108 = por %p106, %p107
      %p109 = scmp.ne.s32.totalorder %s97, %s98
      %p110 = scmp.eq.s32.totalorder %s25, 1
      %p111 = por %p109, %p110
      %p113 = scmp.ne.s32.totalorder %s98, %s112
      %p114 = scmp.eq.s32.totalorder %s25, 0
      %p115 = por %p113, %p114
      %s117 = sadd.s32 %s116, 1
      %p120 = scmp.eq.s32.totalorder %s19, 1
      %p121 = scmp.ne.s32.totalorder %s116, %s118
      %p122 = scmp.eq.s32.totalorder %s19, 0
      %p123 = por %p121, %p122
      %p124 = scmp.ne.s32.totalorder %s116, %s118
      %p125 = scmp.eq.s32.totalorder %s24, 1
      %p126 = por %p124, %p125
      %p127 = scmp.ne.s32.totalorder %s118, %s119
      %p128 = scmp.eq.s32.totalorder %s24, 0
      %p129 = por %p127, %p128
      %p130 = scmp.ne.s32.totalorder %s118, %s119
      %p131 = scmp.eq.s32.totalorder %s25, 1
      %p132 = por %p130, %p131
      %p134 = scmp.ne.s32.totalorder %s119, %s133
      %p135 = scmp.eq.s32.totalorder %s25, 0
      %p136 = por %p134, %p135
      %s138 = sadd.s32 %s137, 1
      %p141 = scmp.eq.s32.totalorder %s19, 1
      %p142 = scmp.ne.s32.totalorder %s137, %s139
      %p143 = scmp.eq.s32.totalorder %s19, 0
      %p144 = por %p142, %p143
      %p145 = scmp.ne.s32.totalorder %s137, %s139
      %p146 = scmp.eq.s32.totalorder %s24, 1
      %p147 = por %p145, %p146
      %p148 = scmp.ne.s32.totalorder %s139, %s140
      %p149 = scmp.eq.s32.totalorder %s24, 0
      %p150 = por %p148, %p149
      %p151 = scmp.ne.s32.totalorder %s139, %s140
      %p152 = scmp.eq.s32.totalorder %s25, 1
      %p153 = por %p151, %p152
      %p155 = scmp.ne.s32.totalorder %s140, %s154
      %p156 = scmp.eq.s32.totalorder %s25, 0
      %p157 = por %p155, %p156
      %s159 = sadd.s32 %s158, 1
      %p162 = scmp.eq.s32.totalorder %s19, 1
      %p163 = scmp.ne.s32.totalorder %s158, %s160
      %p164 = scmp.eq.s32.totalorder %s19, 0
      %p165 = por %p163, %p164
      %p166 = scmp.ne.s32.totalorder %s158, %s160
      %p167 = scmp.eq.s32.totalorder %s24, 1
      %p168 = por %p166, %p167
      %p169 = scmp.ne.s32.totalorder %s160, %s161
      %p170 = scmp.eq.s32.totalorder %s24, 0
      %p171 = por %p169, %p170
      %p172 = scmp.ne.s32.totalorder %s160, %s161
      %p173 = scmp.eq.s32.totalorder %s25, 1
      %p174 = por %p172, %p173
      %p176 = scmp.ne.s32.totalorder %s161, %s175
      %p177 = scmp.eq.s32.totalorder %s25, 0
      %p178 = por %p176, %p177
      %s179 = ssub.s32 %s19, %s26
      %p180 = scmp.eq.s32.totalorder %s179, 0
      %s182 = sadd.s32 %s181, 1
      %s183 = scalar_select %p180, %s181, %s182
      %p186 = pneg %p180
      %p187 = scmp.eq.s32.totalorder %s19, 1
      %p188 = por %p186, %p187
      %p189 = scmp.ne.s32.totalorder %s181, %s184
      %p190 = scmp.eq.s32.totalorder %s19, 0
      %p191 = por %p189, %p190
      %p192 = scmp.ne.s32.totalorder %s181, %s184
      %p193 = scmp.eq.s32.totalorder %s24, 1
      %p194 = por %p192, %p193
      %p195 = scmp.ne.s32.totalorder %s184, %s185
      %p196 = scmp.eq.s32.totalorder %s24, 0
      %p197 = por %p195, %p196
      %p198 = scmp.ne.s32.totalorder %s184, %s185
      %p199 = scmp.eq.s32.totalorder %s25, 1
      %p200 = por %p198, %p199
      %p202 = scmp.ne.s32.totalorder %s185, %s201
      %p203 = scmp.eq.s32.totalorder %s25, 0
      %p204 = por %p202, %p203
      %p205 = scmp.le.s32.totalorder 1, %s19
      %p206 = scmp.lt.s32.totalorder %s19, 3
      %p207 = pnand %p205, %p206
      %p208 = pneg %p207
      // Predicated region
      $region9: #{tpu_custom_call.1} parent=5 // pred_check
        _
      $region10: #{tpu_custom_call.1} parent=5 // pred_check_branch
        %210 = sbr.rel (%p207) target = $region12
      $region11: #{tpu_custom_call.1} parent=5 // pred_region
        %s211 = ssub.s32 %s19, 1
        // Predicated region
        $region13: #{tpu_custom_call.1} parent=11 // pred_check
          %p212 = pneg %p66
        $region14: #{tpu_custom_call.1} parent=11 // pred_check_branch
          %214 = sbr.rel (%p212) target = $region16
        $region15: #{tpu_custom_call.1} parent=11 // pred_region
          _
        $region16: #{tpu_custom_call.1} parent=11 // pred_fallthru
          _
        // Predicated region
        $region17: #{tpu_custom_call.1} parent=11 // pred_check
          %p215 = pneg %p87
        $region18: #{tpu_custom_call.1} parent=11 // pred_check_branch
          %217 = sbr.rel (%p215) target = $region20
        $region19: #{tpu_custom_call.1} parent=11 // pred_region
          _
        $region20: #{tpu_custom_call.1} parent=11 // pred_fallthru
          _
        // Predicated region
        $region21: #{tpu_custom_call.1} parent=11 // pred_check
          %p218 = pneg %p108
        $region22: #{tpu_custom_call.1} parent=11 // pred_check_branch
          %220 = sbr.rel (%p218) target = $region24
        $region23: #{tpu_custom_call.1} parent=11 // pred_region
          _
        $region24: #{tpu_custom_call.1} parent=11 // pred_fallthru
          _
        // Predicated region
        $region25: #{tpu_custom_call.1} parent=11 // pred_check
          %p221 = pneg %p129
        $region26: #{tpu_custom_call.1} parent=11 // pred_check_branch
          %223 = sbr.rel (%p221) target = $region28
        $region27: #{tpu_custom_call.1} parent=11 // pred_region
          _
        $region28: #{tpu_custom_call.1} parent=11 // pred_fallthru
          _
        // Predicated region
        $region29: #{tpu_custom_call.1} parent=11 // pred_check
          %p224 = pneg %p150
        $region30: #{tpu_custom_call.1} parent=11 // pred_check_branch
          %226 = sbr.rel (%p224) target = $region32
        $region31: #{tpu_custom_call.1} parent=11 // pred_region
          _
        $region32: #{tpu_custom_call.1} parent=11 // pred_fallthru
          _
        // Predicated region
        $region33: #{tpu_custom_call.1} parent=11 // pred_check
          %p227 = pneg %p171
        $region34: #{tpu_custom_call.1} parent=11 // pred_check_branch
          %229 = sbr.rel (%p227) target = $region36
        $region35: #{tpu_custom_call.1} parent=11 // pred_region
          _
        $region36: #{tpu_custom_call.1} parent=11 // pred_fallthru
          _
      $region12: #{tpu_custom_call.1} parent=5 // pred_fallthru
        _
      %p230 = scmp.lt.s32.totalorder %s19, 2
      // Predicated region
      $region37: #{tpu_custom_call.1} parent=5 // pred_check
        %p231 = pneg %p230
      $region38: #{tpu_custom_call.1} parent=5 // pred_check_branch
        %233 = sbr.rel (%p231) target = $region40
      $region39: #{tpu_custom_call.1} parent=5 // pred_region
        // Predicated region
        $region41: #{tpu_custom_call.1} parent=39 // pred_check
          %p234 = pneg %p39
        $region42: #{tpu_custom_call.1} parent=39 // pred_check_branch
          %236 = sbr.rel (%p234) target = $region44
        $region43: #{tpu_custom_call.1} parent=39 // pred_region
          %s237 = sand.u32 %s29, 1
          %s238 = scalar_lea.sflag [#allocation3], %s237
          %s239 = sand.u32 %s29, 1
          %s240 = smul.addr %s239, 128
          %s241 = scalar_lea.vmem [#allocation2], %s240
          %243 = vsyncadd %s238, 0
          %s244 = smul.addr %s19, 16
          %s245 = smul.addr %s244, 8
          %s246 = scalar_lea.hbm %s0, %s245
          %s247 = sshll.u32 %s246, 4
          %s248 = int_to_ptr.hbm [resolvable:$true] %s247
          %s249 = sshll.u32 %s241, 4
          %s250 = int_to_ptr.vmem [resolvable:$true] %s249
          %255 = dma.hbm_to_vmem [thread:$0]  %s248, 2048, %s250, %s238, 256, 256, 16
        $region44: #{tpu_custom_call.1} parent=39 // pred_fallthru
          _
      $region40: #{tpu_custom_call.1} parent=5 // pred_fallthru
        _
      %p256 = scmp.le.s32.totalorder 1, %s19
      %p257 = scmp.lt.s32.totalorder %s19, 3
      %p258 = pnand %p256, %p257
      %p259 = pneg %p258
      // Predicated region
      $region45: #{tpu_custom_call.1} parent=5 // pred_check
        _
      $region46: #{tpu_custom_call.1} parent=5 // pred_check_branch
        %261 = sbr.rel (%p258) target = $region48
      $region47: #{tpu_custom_call.1} parent=5 // pred_region
        %s262 = ssub.s32 %s19, 1
        %s263 = sand.u32 %s32, 1
        %s264 = scalar_lea.sflag [#allocation3], %s263
        %s265 = sand.u32 %s32, 1
        %s266 = smul.addr %s265, 128
        %s267 = scalar_lea.vmem [#allocation2], %s266
        // Predicated region
        $region49: #{tpu_custom_call.1} parent=47 // pred_check
          %p268 = pneg %p45
        $region50: #{tpu_custom_call.1} parent=47 // pred_check_branch
          %270 = sbr.rel (%p268) target = $region52
        $region51: #{tpu_custom_call.1} parent=47 // pred_region
          %272 = dma.done %s264, 2048
        $region52: #{tpu_custom_call.1} parent=47 // pred_fallthru
          _
        %s273 = sand.u32 %s32, 1
        %s274 = scalar_lea.sflag [#allocation3], %s273
        %s275 = sand.u32 %s32, 1
        %s276 = smul.addr %s275, 128
        %s277 = scalar_lea.vmem [#allocation2], %s276
        %p278 = pneg %p45
        %p279 = pneg %p42
        %p280 = pneg %p66
        %p281 = pneg %p63
        %p282 = pneg %p87
        %p283 = pneg %p84
        %p284 = pneg %p108
        %p285 = pneg %p105
        %p286 = pneg %p129
        %p287 = pneg %p126
        %p288 = pneg %p150
        %p289 = pneg %p147
        %p290 = pneg %p171
        %p291 = pneg %p168
        %p292 = pneg %p197
        %p293 = pneg %p194
        %s294 = sand.u32 %s184, 1
        %s295 = scalar_lea.sflag [#allocation4], %s294
        %s296 = sand.u32 %s184, 1
        %s297 = smul.addr %s296, 16
        %s298 = scalar_lea.vmem [#allocation5], %s297
        %v300 = vld [vmem:[%s267] sm:$0xff]
        %v301 = vld [vmem:[%s267 + $0x8] sm:$0xff]
        %v302 = vld [vmem:[%s267 + $0x10] sm:$0xff]
        %v303 = vld [vmem:[%s267 + $0x18] sm:$0xff]
        %v304 = vld [vmem:[%s267 + $0x20] sm:$0xff]
        %v305 = vld [vmem:[%s267 + $0x28] sm:$0xff]
        %v306 = vld [vmem:[%s267 + $0x30] sm:$0xff]
        %v307 = vld [vmem:[%s267 + $0x38] sm:$0xff]
        %v308 = vld [vmem:[%s267 + $0x40] sm:$0xff]
        %v309 = vld [vmem:[%s267 + $0x48] sm:$0xff]
        %v310 = vld [vmem:[%s267 + $0x50] sm:$0xff]
        %v311 = vld [vmem:[%s267 + $0x58] sm:$0xff]
        %v312 = vld [vmem:[%s267 + $0x60] sm:$0xff]
        %v313 = vld [vmem:[%s267 + $0x68] sm:$0xff]
        %v314 = vld [vmem:[%s267 + $0x70] sm:$0xff]
        %v315 = vld [vmem:[%s267 + $0x78] sm:$0xff]
        %v316 = vadd.f32 %v300, %v301
        %317 = vadd.xlane.f32.xlu0 %v316
        %v318 = vpop.xlane.xlu0 %317
        %v319 = vadd.f32 %v302, %v303
        %320 = vadd.xlane.f32.xlu0 %v319
        %v321 = vpop.xlane.xlu0 %320
        %v322 = vadd.f32 %v304, %v305
        %323 = vadd.xlane.f32.xlu0 %v322
        %v324 = vpop.xlane.xlu0 %323
        %v325 = vadd.f32 %v306, %v307
        %326 = vadd.xlane.f32.xlu0 %v325
        %v327 = vpop.xlane.xlu0 %326
        %v328 = vadd.f32 %v308, %v309
        %329 = vadd.xlane.f32.xlu0 %v328
        %v330 = vpop.xlane.xlu0 %329
        %v331 = vadd.f32 %v310, %v311
        %332 = vadd.xlane.f32.xlu0 %v331
        %v333 = vpop.xlane.xlu0 %332
        %v334 = vadd.f32 %v312, %v313
        %335 = vadd.xlane.f32.xlu0 %v334
        %v336 = vpop.xlane.xlu0 %335
        %v337 = vadd.f32 %v314, %v315
        %338 = vadd.xlane.f32.xlu0 %v337
        %v339 = vpop.xlane.xlu0 %338
        %v340 = vmul.f32 %v300, %v300
        %v341 = vmul.f32 %v301, %v301
        %v342 = vmul.f32 %v302, %v302
        %v343 = vmul.f32 %v303, %v303
        %v344 = vmul.f32 %v304, %v304
        %v345 = vmul.f32 %v305, %v305
        %v346 = vmul.f32 %v306, %v306
        %v347 = vmul.f32 %v307, %v307
        %v348 = vmul.f32 %v308, %v308
        %v349 = vmul.f32 %v309, %v309
        %v350 = vmul.f32 %v310, %v310
        %v351 = vmul.f32 %v311, %v311
        %v352 = vmul.f32 %v312, %v312
        %v353 = vmul.f32 %v313, %v313
        %v354 = vmul.f32 %v314, %v314
        %v355 = vmul.f32 %v315, %v315
        %v356 = vadd.f32 %v340, %v341
        %357 = vadd.xlane.f32.xlu0 %v356
        %v358 = vpop.xlane.xlu0 %357
        %v359 = vadd.f32 %v342, %v343
        %360 = vadd.xlane.f32.xlu0 %v359
        %v361 = vpop.xlane.xlu0 %360
        %v362 = vadd.f32 %v344, %v345
        %363 = vadd.xlane.f32.xlu0 %v362
        %v364 = vpop.xlane.xlu0 %363
        %v365 = vadd.f32 %v346, %v347
        %366 = vadd.xlane.f32.xlu0 %v365
        %v367 = vpop.xlane.xlu0 %366
        %v368 = vadd.f32 %v348, %v349
        %369 = vadd.xlane.f32.xlu0 %v368
        %v370 = vpop.xlane.xlu0 %369
        %v371 = vadd.f32 %v350, %v351
        %372 = vadd.xlane.f32.xlu0 %v371
        %v373 = vpop.xlane.xlu0 %372
        %v374 = vadd.f32 %v352, %v353
        %375 = vadd.xlane.f32.xlu0 %v374
        %v376 = vpop.xlane.xlu0 %375
        %v377 = vadd.f32 %v354, %v355
        %378 = vadd.xlane.f32.xlu0 %v377
        %v379 = vpop.xlane.xlu0 %378
        %vm380 = vcmask 7168
        %v381 = vsel %vm380, %v318, %v358
        %v382 = vsel %vm380, %v321, %v361
        %v383 = vsel %vm380, %v324, %v364
        %v384 = vsel %vm380, %v327, %v367
        %v385 = vsel %vm380, %v330, %v370
        %v386 = vsel %vm380, %v333, %v373
        %v387 = vsel %vm380, %v336, %v376
        %v388 = vsel %vm380, %v339, %v379
        %v389 = vld [vmem:[%s5] sm:$0xff]
        %v390 = vld [vmem:[%s5 + $0x8] sm:$0xff]
        %v391 = vld [vmem:[%s5 + $0x10] sm:$0xff]
        %v392 = vld [vmem:[%s5 + $0x18] sm:$0xff]
        %v393 = vld [vmem:[%s5 + $0x20] sm:$0xff]
        %v394 = vld [vmem:[%s5 + $0x28] sm:$0xff]
        %v395 = vld [vmem:[%s5 + $0x30] sm:$0xff]
        %v396 = vld [vmem:[%s5 + $0x38] sm:$0xff]
        %vm397 = vcmask 523264
        %v399 = vsel %vm397, %v389, 0
        %v402 = vsel %vm397, %v390, 0
        %v405 = vsel %vm397, %v391, 0
        %v408 = vsel %vm397, %v392, 0
        %v411 = vsel %vm397, %v393, 0
        %v414 = vsel %vm397, %v394, 0
        %v417 = vsel %vm397, %v395, 0
        %v420 = vsel %vm397, %v396, 0
        %422 = vmatpush.msra.mxu0 0.0
        %423 = vmatpush.msra.mxu0 0.0
        %424 = vmatpush.msra.mxu0 0.0
        %425 = vmatpush.msra.mxu0 0.0
        %426 = vmatpush.msra.mxu0 0.0
        %427 = vmatpush.msra.mxu0 0.0
        %428 = vmatpush.msra.mxu0 0.0
        %429 = vmatpush.msra.mxu0 0.0
        %430 = vmatpush.msra.mxu0 %v388
        %431 = vmatpush.msra.mxu0 %v387
        %432 = vmatpush.msra.mxu0 %v386
        %433 = vmatpush.msra.mxu0 %v385
        %434 = vmatpush.msra.mxu0 %v384
        %435 = vmatpush.msra.mxu0 %v383
        %436 = vmatpush.msra.mxu0 %v382
        %437 = vmatpush.msra.mxu0 %v381
        %438 = vmatmul.f32.gmra.mxu0 %v399
        %v439 = vpop.f32.mrf.mxu0
        %v440 = vadd.f32 0.0, %v439
        %441 = vmatmul.f32.gmra.mxu0 %v402
        %v442 = vpop.f32.mrf.mxu0
        %v443 = vadd.f32 0.0, %v442
        %444 = vmatmul.f32.gmra.mxu0 %v405
        %v445 = vpop.f32.mrf.mxu0
        %v446 = vadd.f32 0.0, %v445
        %447 = vmatmul.f32.gmra.mxu0 %v408
        %v448 = vpop.f32.mrf.mxu0
        %v449 = vadd.f32 0.0, %v448
        %450 = vmatmul.f32.gmra.mxu0 %v411
        %v451 = vpop.f32.mrf.mxu0
        %v452 = vadd.f32 0.0, %v451
        %453 = vmatmul.f32.gmra.mxu0 %v414
        %v454 = vpop.f32.mrf.mxu0
        %v455 = vadd.f32 0.0, %v454
        %456 = vmatmul.f32.gmra.mxu0 %v417
        %v457 = vpop.f32.mrf.mxu0
        %v458 = vadd.f32 0.0, %v457
        %459 = vmatmul.f32.gmra.mxu0 %v420
        %v460 = vpop.f32.mrf.mxu0
        %v461 = vadd.f32 0.0, %v460
        %462 = vdwg.mxu0
        %v463 = vmul.f32 %v440, 0.001953125
        %v464 = vmul.f32 %v443, 0.001953125
        %v465 = vmul.f32 %v446, 0.001953125
        %v466 = vmul.f32 %v449, 0.001953125
        %v467 = vmul.f32 %v452, 0.001953125
        %v468 = vmul.f32 %v455, 0.001953125
        %v469 = vmul.f32 %v458, 0.001953125
        %v470 = vmul.f32 %v461, 0.001953125
        %v471 = vmul.f32 %v463, %v463
        %v472 = vmul.f32 %v464, %v464
        %v473 = vmul.f32 %v465, %v465
        %v474 = vmul.f32 %v466, %v466
        %v475 = vmul.f32 %v467, %v467
        %v476 = vmul.f32 %v468, %v468
        %v477 = vmul.f32 %v469, %v469
        %v478 = vmul.f32 %v470, %v470
        %487 = vrot.lane.b32.xlu0 %v471, 1
        %v488 = vpop.permute.xlu0 %487
        %489 = vrot.lane.b32.xlu0 %v472, 1
        %v490 = vpop.permute.xlu0 %489
        %491 = vrot.lane.b32.xlu0 %v473, 1
        %v492 = vpop.permute.xlu0 %491
        %493 = vrot.lane.b32.xlu0 %v474, 1
        %v494 = vpop.permute.xlu0 %493
        %495 = vrot.lane.b32.xlu0 %v475, 1
        %v496 = vpop.permute.xlu0 %495
        %497 = vrot.lane.b32.xlu0 %v476, 1
        %v498 = vpop.permute.xlu0 %497
        %499 = vrot.lane.b32.xlu0 %v477, 1
        %v500 = vpop.permute.xlu0 %499
        %501 = vrot.lane.b32.xlu0 %v478, 1
        %v502 = vpop.permute.xlu0 %501
        %v511 = vsub.f32 %v463, %v488
        %v512 = vsub.f32 %v464, %v490
        %v513 = vsub.f32 %v465, %v492
        %v514 = vsub.f32 %v466, %v494
        %v515 = vsub.f32 %v467, %v496
        %v516 = vsub.f32 %v468, %v498
        %v517 = vsub.f32 %v469, %v500
        %v518 = vsub.f32 %v470, %v502
        %v519 = vadd.f32 %v511, 1e-05
        %v520 = vadd.f32 %v512, 1e-05
        %v521 = vadd.f32 %v513, 1e-05
        %v522 = vadd.f32 %v514, 1e-05
        %v523 = vadd.f32 %v515, 1e-05
        %v524 = vadd.f32 %v516, 1e-05
        %v525 = vadd.f32 %v517, 1e-05
        %v526 = vadd.f32 %v518, 1e-05
        %v527 = vrsqrt.pop %v519
        %v528 = vmul.f32 %v527, %v519
        %v529 = vmul.f32 %v528, %v527
        %v530 = vmul.f32 0.5, %v529
        %v531 = vsub.f32 1.5, %v530
        %v532 = vmul.f32 %v527, %v531
        %vm533 = vweird.f32 %v519
        %vm534 = vweird.f32 %v527
        %vm535 = vmor %vm533, %vm534
        %v536 = vsel %vm535, %v527, %v532
        %v537 = vrsqrt.pop %v520
        %v538 = vmul.f32 %v537, %v520
        %v539 = vmul.f32 %v538, %v537
        %v540 = vmul.f32 0.5, %v539
        %v541 = vsub.f32 1.5, %v540
        %v542 = vmul.f32 %v537, %v541
        %vm543 = vweird.f32 %v520
        %vm544 = vweird.f32 %v537
        %vm545 = vmor %vm543, %vm544
        %v546 = vsel %vm545, %v537, %v542
        %v547 = vrsqrt.pop %v521
        %v548 = vmul.f32 %v547, %v521
        %v549 = vmul.f32 %v548, %v547
        %v550 = vmul.f32 0.5, %v549
        %v551 = vsub.f32 1.5, %v550
        %v552 = vmul.f32 %v547, %v551
        %vm553 = vweird.f32 %v521
        %vm554 = vweird.f32 %v547
        %vm555 = vmor %vm553, %vm554
        %v556 = vsel %vm555, %v547, %v552
        %v557 = vrsqrt.pop %v522
        %v558 = vmul.f32 %v557, %v522
        %v559 = vmul.f32 %v558, %v557
        %v560 = vmul.f32 0.5, %v559
        %v561 = vsub.f32 1.5, %v560
        %v562 = vmul.f32 %v557, %v561
        %vm563 = vweird.f32 %v522
        %vm564 = vweird.f32 %v557
        %vm565 = vmor %vm563, %vm564
        %v566 = vsel %vm565, %v557, %v562
        %v567 = vrsqrt.pop %v523
        %v568 = vmul.f32 %v567, %v523
        %v569 = vmul.f32 %v568, %v567
        %v570 = vmul.f32 0.5, %v569
        %v571 = vsub.f32 1.5, %v570
        %v572 = vmul.f32 %v567, %v571
        %vm573 = vweird.f32 %v523
        %vm574 = vweird.f32 %v567
        %vm575 = vmor %vm573, %vm574
        %v576 = vsel %vm575, %v567, %v572
        %v577 = vrsqrt.pop %v524
        %v578 = vmul.f32 %v577, %v524
        %v579 = vmul.f32 %v578, %v577
        %v580 = vmul.f32 0.5, %v579
        %v581 = vsub.f32 1.5, %v580
        %v582 = vmul.f32 %v577, %v581
        %vm583 = vweird.f32 %v524
        %vm584 = vweird.f32 %v577
        %vm585 = vmor %vm583, %vm584
        %v586 = vsel %vm585, %v577, %v582
        %v587 = vrsqrt.pop %v525
        %v588 = vmul.f32 %v587, %v525
        %v589 = vmul.f32 %v588, %v587
        %v590 = vmul.f32 0.5, %v589
        %v591 = vsub.f32 1.5, %v590
        %v592 = vmul.f32 %v587, %v591
        %vm593 = vweird.f32 %v525
        %vm594 = vweird.f32 %v587
        %vm595 = vmor %vm593, %vm594
        %v596 = vsel %vm595, %v587, %v592
        %v597 = vrsqrt.pop %v526
        %v598 = vmul.f32 %v597, %v526
        %v599 = vmul.f32 %v598, %v597
        %v600 = vmul.f32 0.5, %v599
        %v601 = vsub.f32 1.5, %v600
        %v602 = vmul.f32 %v597, %v601
        %vm603 = vweird.f32 %v526
        %vm604 = vweird.f32 %v597
        %vm605 = vmor %vm603, %vm604
        %v606 = vsel %vm605, %v597, %v602
        %v607 = vld [vmem:[%s1] sm:$0xff]
        %v608 = vld [vmem:[%s1 + $0x8] sm:$0xff]
        %v609 = vld [vmem:[%s1 + $0x10] sm:$0xff]
        %v610 = vld [vmem:[%s1 + $0x18] sm:$0xff]
        %v611 = vld [vmem:[%s1 + $0x20] sm:$0xff]
        %v612 = vld [vmem:[%s1 + $0x28] sm:$0xff]
        %v613 = vld [vmem:[%s1 + $0x30] sm:$0xff]
        %v614 = vld [vmem:[%s1 + $0x38] sm:$0xff]
        %623 = vrot.lane.b32.xlu0 %v607, 1
        %v624 = vpop.permute.xlu0 %623
        %625 = vrot.lane.b32.xlu0 %v608, 1
        %v626 = vpop.permute.xlu0 %625
        %627 = vrot.lane.b32.xlu0 %v609, 1
        %v628 = vpop.permute.xlu0 %627
        %629 = vrot.lane.b32.xlu0 %v610, 1
        %v630 = vpop.permute.xlu0 %629
        %631 = vrot.lane.b32.xlu0 %v611, 1
        %v632 = vpop.permute.xlu0 %631
        %633 = vrot.lane.b32.xlu0 %v612, 1
        %v634 = vpop.permute.xlu0 %633
        %635 = vrot.lane.b32.xlu0 %v613, 1
        %v636 = vpop.permute.xlu0 %635
        %637 = vrot.lane.b32.xlu0 %v614, 1
        %v638 = vpop.permute.xlu0 %637
        %v647 = vmul.f32 %v536, %v624
        %v648 = vmul.f32 %v546, %v626
        %v649 = vmul.f32 %v556, %v628
        %v650 = vmul.f32 %v566, %v630
        %v651 = vmul.f32 %v576, %v632
        %v652 = vmul.f32 %v586, %v634
        %v653 = vmul.f32 %v596, %v636
        %v654 = vmul.f32 %v606, %v638
        %v655 = vld [vmem:[%s2] sm:$0xff]
        %v656 = vld [vmem:[%s2 + $0x8] sm:$0xff]
        %v657 = vld [vmem:[%s2 + $0x10] sm:$0xff]
        %v658 = vld [vmem:[%s2 + $0x18] sm:$0xff]
        %v659 = vld [vmem:[%s2 + $0x20] sm:$0xff]
        %v660 = vld [vmem:[%s2 + $0x28] sm:$0xff]
        %v661 = vld [vmem:[%s2 + $0x30] sm:$0xff]
        %v662 = vld [vmem:[%s2 + $0x38] sm:$0xff]
        %671 = vrot.lane.b32.xlu0 %v647, 127
        %v672 = vpop.permute.xlu0 %671
        %673 = vrot.lane.b32.xlu0 %v648, 127
        %v674 = vpop.permute.xlu0 %673
        %675 = vrot.lane.b32.xlu0 %v649, 127
        %v676 = vpop.permute.xlu0 %675
        %677 = vrot.lane.b32.xlu0 %v650, 127
        %v678 = vpop.permute.xlu0 %677
        %679 = vrot.lane.b32.xlu0 %v651, 127
        %v680 = vpop.permute.xlu0 %679
        %681 = vrot.lane.b32.xlu0 %v652, 127
        %v682 = vpop.permute.xlu0 %681
        %683 = vrot.lane.b32.xlu0 %v653, 127
        %v684 = vpop.permute.xlu0 %683
        %685 = vrot.lane.b32.xlu0 %v654, 127
        %v686 = vpop.permute.xlu0 %685
        %v695 = vmul.f32 %v463, %v672
        %v696 = vmul.f32 %v464, %v674
        %v697 = vmul.f32 %v465, %v676
        %v698 = vmul.f32 %v466, %v678
        %v699 = vmul.f32 %v467, %v680
        %v700 = vmul.f32 %v468, %v682
        %v701 = vmul.f32 %v469, %v684
        %v702 = vmul.f32 %v470, %v686
        %v703 = vsub.f32 %v655, %v695
        %v704 = vsub.f32 %v656, %v696
        %v705 = vsub.f32 %v657, %v697
        %v706 = vsub.f32 %v658, %v698
        %v707 = vsub.f32 %v659, %v699
        %v708 = vsub.f32 %v660, %v700
        %v709 = vsub.f32 %v661, %v701
        %v710 = vsub.f32 %v662, %v702
        %v711 = vpack.c.bf16 %v301, %v300
        %v712 = vpack.c.bf16 %v303, %v302
        %v713 = vpack.c.bf16 %v305, %v304
        %v714 = vpack.c.bf16 %v307, %v306
        %v715 = vpack.c.bf16 %v309, %v308
        %v716 = vpack.c.bf16 %v311, %v310
        %v717 = vpack.c.bf16 %v313, %v312
        %v718 = vpack.c.bf16 %v315, %v314
        %v719 = vpack.c.bf16 %v647, %v647
        %v720 = vpack.c.bf16 %v648, %v648
        %v721 = vpack.c.bf16 %v649, %v649
        %v722 = vpack.c.bf16 %v650, %v650
        %v723 = vpack.c.bf16 %v651, %v651
        %v724 = vpack.c.bf16 %v652, %v652
        %v725 = vpack.c.bf16 %v653, %v653
        %v726 = vpack.c.bf16 %v654, %v654
        %728 = vset.pattern.permute.xlu0 1
        %729 = vperm.xlu0 %728, %v719
        %v730 = vpop.permute.xlu0 %729
        %v733 = vunpack.c.l.s4 839922192
        %v734 = vunpack.c.0.s8 %v733
        %v735 = vperm.slane %v730, %v734
        %737 = vset.pattern.permute.xlu0 1
        %738 = vperm.xlu0 %737, %v720
        %v739 = vpop.permute.xlu0 %738
        %v742 = vunpack.c.l.s4 839922192
        %v743 = vunpack.c.0.s8 %v742
        %v744 = vperm.slane %v739, %v743
        %746 = vset.pattern.permute.xlu0 1
        %747 = vperm.xlu0 %746, %v721
        %v748 = vpop.permute.xlu0 %747
        %v751 = vunpack.c.l.s4 839922192
        %v752 = vunpack.c.0.s8 %v751
        %v753 = vperm.slane %v748, %v752
        %755 = vset.pattern.permute.xlu0 1
        %756 = vperm.xlu0 %755, %v722
        %v757 = vpop.permute.xlu0 %756
        %v760 = vunpack.c.l.s4 839922192
        %v761 = vunpack.c.0.s8 %v760
        %v762 = vperm.slane %v757, %v761
        %764 = vset.pattern.permute.xlu0 1
        %765 = vperm.xlu0 %764, %v723
        %v766 = vpop.permute.xlu0 %765
        %v769 = vunpack.c.l.s4 839922192
        %v770 = vunpack.c.0.s8 %v769
        %v771 = vperm.slane %v766, %v770
        %773 = vset.pattern.permute.xlu0 1
        %774 = vperm.xlu0 %773, %v724
        %v775 = vpop.permute.xlu0 %774
        %v778 = vunpack.c.l.s4 839922192
        %v779 = vunpack.c.0.s8 %v778
        %v780 = vperm.slane %v775, %v779
        %782 = vset.pattern.permute.xlu0 1
        %783 = vperm.xlu0 %782, %v725
        %v784 = vpop.permute.xlu0 %783
        %v787 = vunpack.c.l.s4 839922192
        %v788 = vunpack.c.0.s8 %v787
        %v789 = vperm.slane %v784, %v788
        %791 = vset.pattern.permute.xlu0 1
        %792 = vperm.xlu0 %791, %v726
        %v793 = vpop.permute.xlu0 %792
        %v796 = vunpack.c.l.s4 839922192
        %v797 = vunpack.c.0.s8 %v796
        %v798 = vperm.slane %v793, %v797
        %v799 = vunpack.c.l.bf16 %v711
        %v800 = vunpack.c.h.bf16 %v711
        %v801 = vunpack.c.l.bf16 %v712
        %v802 = vunpack.c.h.bf16 %v712
        %v803 = vunpack.c.l.bf16 %v713
        %v804 = vunpack.c.h.bf16 %v713
        %v805 = vunpack.c.l.bf16 %v714
        %v806 = vunpack.c.h.bf16 %v714
        %v807 = vunpack.c.l.bf16 %v715
        %v808 = vunpack.c.h.bf16 %v715
        %v809 = vunpack.c.l.bf16 %v716
        %v810 = vunpack.c.h.bf16 %v716
        %v811 = vunpack.c.l.bf16 %v717
        %v812 = vunpack.c.h.bf16 %v717
        %v813 = vunpack.c.l.bf16 %v718
        %v814 = vunpack.c.h.bf16 %v718
        %v815 = vunpack.c.l.bf16 %v735
        %v816 = vunpack.c.l.bf16 %v744
        %v817 = vunpack.c.l.bf16 %v753
        %v818 = vunpack.c.l.bf16 %v762
        %v819 = vunpack.c.l.bf16 %v771
        %v820 = vunpack.c.l.bf16 %v780
        %v821 = vunpack.c.l.bf16 %v789
        %v822 = vunpack.c.l.bf16 %v798
        %v823 = vmul.f32 %v799, %v815
        %v824 = vmul.f32 %v800, %v815
        %v825 = vmul.f32 %v801, %v816
        %v826 = vmul.f32 %v802, %v816
        %v827 = vmul.f32 %v803, %v817
        %v828 = vmul.f32 %v804, %v817
        %v829 = vmul.f32 %v805, %v818
        %v830 = vmul.f32 %v806, %v818
        %v831 = vmul.f32 %v807, %v819
        %v832 = vmul.f32 %v808, %v819
        %v833 = vmul.f32 %v809, %v820
        %v834 = vmul.f32 %v810, %v820
        %v835 = vmul.f32 %v811, %v821
        %v836 = vmul.f32 %v812, %v821
        %v837 = vmul.f32 %v813, %v822
        %v838 = vmul.f32 %v814, %v822
        %v839 = vpack.c.bf16 %v824, %v823
        %v840 = vpack.c.bf16 %v826, %v825
        %v841 = vpack.c.bf16 %v828, %v827
        %v842 = vpack.c.bf16 %v830, %v829
        %v843 = vpack.c.bf16 %v832, %v831
        %v844 = vpack.c.bf16 %v834, %v833
        %v845 = vpack.c.bf16 %v836, %v835
        %v846 = vpack.c.bf16 %v838, %v837
        %v847 = vpack.c.bf16 %v703, %v703
        %v848 = vpack.c.bf16 %v704, %v704
        %v849 = vpack.c.bf16 %v705, %v705
        %v850 = vpack.c.bf16 %v706, %v706
        %v851 = vpack.c.bf16 %v707, %v707
        %v852 = vpack.c.bf16 %v708, %v708
        %v853 = vpack.c.bf16 %v709, %v709
        %v854 = vpack.c.bf16 %v710, %v710
        %856 = vset.pattern.permute.xlu0 0
        %857 = vperm.xlu0 %856, %v847
        %v858 = vpop.permute.xlu0 %857
        %v861 = vunpack.c.l.s4 839922192
        %v862 = vunpack.c.0.s8 %v861
        %v863 = vperm.slane %v858, %v862
        %865 = vset.pattern.permute.xlu0 0
        %866 = vperm.xlu0 %865, %v848
        %v867 = vpop.permute.xlu0 %866
        %v870 = vunpack.c.l.s4 839922192
        %v871 = vunpack.c.0.s8 %v870
        %v872 = vperm.slane %v867, %v871
        %874 = vset.pattern.permute.xlu0 0
        %875 = vperm.xlu0 %874, %v849
        %v876 = vpop.permute.xlu0 %875
        %v879 = vunpack.c.l.s4 839922192
        %v880 = vunpack.c.0.s8 %v879
        %v881 = vperm.slane %v876, %v880
        %883 = vset.pattern.permute.xlu0 0
        %884 = vperm.xlu0 %883, %v850
        %v885 = vpop.permute.xlu0 %884
        %v888 = vunpack.c.l.s4 839922192
        %v889 = vunpack.c.0.s8 %v888
        %v890 = vperm.slane %v885, %v889
        %892 = vset.pattern.permute.xlu0 0
        %893 = vperm.xlu0 %892, %v851
        %v894 = vpop.permute.xlu0 %893
        %v897 = vunpack.c.l.s4 839922192
        %v898 = vunpack.c.0.s8 %v897
        %v899 = vperm.slane %v894, %v898
        %901 = vset.pattern.permute.xlu0 0
        %902 = vperm.xlu0 %901, %v852
        %v903 = vpop.permute.xlu0 %902
        %v906 = vunpack.c.l.s4 839922192
        %v907 = vunpack.c.0.s8 %v906
        %v908 = vperm.slane %v903, %v907
        %910 = vset.pattern.permute.xlu0 0
        %911 = vperm.xlu0 %910, %v853
        %v912 = vpop.permute.xlu0 %911
        %v915 = vunpack.c.l.s4 839922192
        %v916 = vunpack.c.0.s8 %v915
        %v917 = vperm.slane %v912, %v916
        %919 = vset.pattern.permute.xlu0 0
        %920 = vperm.xlu0 %919, %v854
        %v921 = vpop.permute.xlu0 %920
        %v924 = vunpack.c.l.s4 839922192
        %v925 = vunpack.c.0.s8 %v924
        %v926 = vperm.slane %v921, %v925
        %v927 = vunpack.c.l.bf16 %v839
        %v928 = vunpack.c.h.bf16 %v839
        %v929 = vunpack.c.l.bf16 %v840
        %v930 = vunpack.c.h.bf16 %v840
        %v931 = vunpack.c.l.bf16 %v841
        %v932 = vunpack.c.h.bf16 %v841
        %v933 = vunpack.c.l.bf16 %v842
        %v934 = vunpack.c.h.bf16 %v842
        %v935 = vunpack.c.l.bf16 %v843
        %v936 = vunpack.c.h.bf16 %v843
        %v937 = vunpack.c.l.bf16 %v844
        %v938 = vunpack.c.h.bf16 %v844
        %v939 = vunpack.c.l.bf16 %v845
        %v940 = vunpack.c.h.bf16 %v845
        %v941 = vunpack.c.l.bf16 %v846
        %v942 = vunpack.c.h.bf16 %v846
        %v943 = vunpack.c.l.bf16 %v863
        %v944 = vunpack.c.l.bf16 %v872
        %v945 = vunpack.c.l.bf16 %v881
        %v946 = vunpack.c.l.bf16 %v890
        %v947 = vunpack.c.l.bf16 %v899
        %v948 = vunpack.c.l.bf16 %v908
        %v949 = vunpack.c.l.bf16 %v917
        %v950 = vunpack.c.l.bf16 %v926
        %v951 = vadd.f32 %v927, %v943
        %v952 = vadd.f32 %v928, %v943
        %v953 = vadd.f32 %v929, %v944
        %v954 = vadd.f32 %v930, %v944
        %v955 = vadd.f32 %v931, %v945
        %v956 = vadd.f32 %v932, %v945
        %v957 = vadd.f32 %v933, %v946
        %v958 = vadd.f32 %v934, %v946
        %v959 = vadd.f32 %v935, %v947
        %v960 = vadd.f32 %v936, %v947
        %v961 = vadd.f32 %v937, %v948
        %v962 = vadd.f32 %v938, %v948
        %v963 = vadd.f32 %v939, %v949
        %v964 = vadd.f32 %v940, %v949
        %v965 = vadd.f32 %v941, %v950
        %v966 = vadd.f32 %v942, %v950
        %v967 = vpack.c.bf16 %v952, %v951
        %v968 = vpack.c.bf16 %v954, %v953
        %v969 = vpack.c.bf16 %v956, %v955
        %v970 = vpack.c.bf16 %v958, %v957
        %v971 = vpack.c.bf16 %v960, %v959
        %v972 = vpack.c.bf16 %v962, %v961
        %v973 = vpack.c.bf16 %v964, %v963
        %v974 = vpack.c.bf16 %v966, %v965
        %v975 = vunpack.c.l.bf16 %v967
        %v976 = vunpack.c.h.bf16 %v967
        %v977 = vunpack.c.l.bf16 %v968
        %v978 = vunpack.c.h.bf16 %v968
        %v979 = vunpack.c.l.bf16 %v969
        %v980 = vunpack.c.h.bf16 %v969
        %v981 = vunpack.c.l.bf16 %v970
        %v982 = vunpack.c.h.bf16 %v970
        %v983 = vunpack.c.l.bf16 %v971
        %v984 = vunpack.c.h.bf16 %v971
        %v985 = vunpack.c.l.bf16 %v972
        %v986 = vunpack.c.h.bf16 %v972
        %v987 = vunpack.c.l.bf16 %v973
        %v988 = vunpack.c.h.bf16 %v973
        %v989 = vunpack.c.l.bf16 %v974
        %v990 = vunpack.c.h.bf16 %v974
        %v991 = vmul.f32 %v975, 0.5
        %v992 = vmul.f32 %v976, 0.5
        %v993 = vmul.f32 %v977, 0.5
        %v994 = vmul.f32 %v978, 0.5
        %v995 = vmul.f32 %v979, 0.5
        %v996 = vmul.f32 %v980, 0.5
        %v997 = vmul.f32 %v981, 0.5
        %v998 = vmul.f32 %v982, 0.5
        %v999 = vmul.f32 %v983, 0.5
        %v1000 = vmul.f32 %v984, 0.5
        %v1001 = vmul.f32 %v985, 0.5
        %v1002 = vmul.f32 %v986, 0.5
        %v1003 = vmul.f32 %v987, 0.5
        %v1004 = vmul.f32 %v988, 0.5
        %v1005 = vmul.f32 %v989, 0.5
        %v1006 = vmul.f32 %v990, 0.5
        %v1007 = vpack.c.bf16 %v992, %v991
        %v1008 = vpack.c.bf16 %v994, %v993
        %v1009 = vpack.c.bf16 %v996, %v995
        %v1010 = vpack.c.bf16 %v998, %v997
        %v1011 = vpack.c.bf16 %v1000, %v999
        %v1012 = vpack.c.bf16 %v1002, %v1001
        %v1013 = vpack.c.bf16 %v1004, %v1003
        %v1014 = vpack.c.bf16 %v1006, %v1005
        %v1015 = vunpack.c.l.bf16 %v1007
        %v1016 = vunpack.c.h.bf16 %v1007
        %v1017 = vunpack.c.l.bf16 %v1008
        %v1018 = vunpack.c.h.bf16 %v1008
        %v1019 = vunpack.c.l.bf16 %v1009
        %v1020 = vunpack.c.h.bf16 %v1009
        %v1021 = vunpack.c.l.bf16 %v1010
        %v1022 = vunpack.c.h.bf16 %v1010
        %v1023 = vunpack.c.l.bf16 %v1011
        %v1024 = vunpack.c.h.bf16 %v1011
        %v1025 = vunpack.c.l.bf16 %v1012
        %v1026 = vunpack.c.h.bf16 %v1012
        %v1027 = vunpack.c.l.bf16 %v1013
        %v1028 = vunpack.c.h.bf16 %v1013
        %v1029 = vunpack.c.l.bf16 %v1014
        %v1030 = vunpack.c.h.bf16 %v1014
        %v1031 = vtanh.pop %v1015
        %v1032 = vtanh.pop %v1016
        %v1033 = vtanh.pop %v1017
        %v1034 = vtanh.pop %v1018
        %v1035 = vtanh.pop %v1019
        %v1036 = vtanh.pop %v1020
        %v1037 = vtanh.pop %v1021
        %v1038 = vtanh.pop %v1022
        %v1039 = vtanh.pop %v1023
        %v1040 = vtanh.pop %v1024
        %v1041 = vtanh.pop %v1025
        %v1042 = vtanh.pop %v1026
        %v1043 = vtanh.pop %v1027
        %v1044 = vtanh.pop %v1028
        %v1045 = vtanh.pop %v1029
        %v1046 = vtanh.pop %v1030
        %v1047 = vpack.c.bf16 %v1032, %v1031
        %v1048 = vpack.c.bf16 %v1034, %v1033
        %v1049 = vpack.c.bf16 %v1036, %v1035
        %v1050 = vpack.c.bf16 %v1038, %v1037
        %v1051 = vpack.c.bf16 %v1040, %v1039
        %v1052 = vpack.c.bf16 %v1042, %v1041
        %v1053 = vpack.c.bf16 %v1044, %v1043
        %v1054 = vpack.c.bf16 %v1046, %v1045
        %v1055 = vunpack.c.l.bf16 %v1047
        %v1056 = vunpack.c.h.bf16 %v1047
        %v1057 = vunpack.c.l.bf16 %v1048
        %v1058 = vunpack.c.h.bf16 %v1048
        %v1059 = vunpack.c.l.bf16 %v1049
        %v1060 = vunpack.c.h.bf16 %v1049
        %v1061 = vunpack.c.l.bf16 %v1050
        %v1062 = vunpack.c.h.bf16 %v1050
        %v1063 = vunpack.c.l.bf16 %v1051
        %v1064 = vunpack.c.h.bf16 %v1051
        %v1065 = vunpack.c.l.bf16 %v1052
        %v1066 = vunpack.c.h.bf16 %v1052
        %v1067 = vunpack.c.l.bf16 %v1053
        %v1068 = vunpack.c.h.bf16 %v1053
        %v1069 = vunpack.c.l.bf16 %v1054
        %v1070 = vunpack.c.h.bf16 %v1054
        %v1071 = vmul.f32 %v1055, 0.5
        %v1072 = vmul.f32 %v1056, 0.5
        %v1073 = vmul.f32 %v1057, 0.5
        %v1074 = vmul.f32 %v1058, 0.5
        %v1075 = vmul.f32 %v1059, 0.5
        %v1076 = vmul.f32 %v1060, 0.5
        %v1077 = vmul.f32 %v1061, 0.5
        %v1078 = vmul.f32 %v1062, 0.5
        %v1079 = vmul.f32 %v1063, 0.5
        %v1080 = vmul.f32 %v1064, 0.5
        %v1081 = vmul.f32 %v1065, 0.5
        %v1082 = vmul.f32 %v1066, 0.5
        %v1083 = vmul.f32 %v1067, 0.5
        %v1084 = vmul.f32 %v1068, 0.5
        %v1085 = vmul.f32 %v1069, 0.5
        %v1086 = vmul.f32 %v1070, 0.5
        %v1087 = vpack.c.bf16 %v1072, %v1071
        %v1088 = vpack.c.bf16 %v1074, %v1073
        %v1089 = vpack.c.bf16 %v1076, %v1075
        %v1090 = vpack.c.bf16 %v1078, %v1077
        %v1091 = vpack.c.bf16 %v1080, %v1079
        %v1092 = vpack.c.bf16 %v1082, %v1081
        %v1093 = vpack.c.bf16 %v1084, %v1083
        %v1094 = vpack.c.bf16 %v1086, %v1085
        %v1095 = vunpack.c.l.bf16 %v1087
        %v1096 = vunpack.c.h.bf16 %v1087
        %v1097 = vunpack.c.l.bf16 %v1088
        %v1098 = vunpack.c.h.bf16 %v1088
        %v1099 = vunpack.c.l.bf16 %v1089
        %v1100 = vunpack.c.h.bf16 %v1089
        %v1101 = vunpack.c.l.bf16 %v1090
        %v1102 = vunpack.c.h.bf16 %v1090
        %v1103 = vunpack.c.l.bf16 %v1091
        %v1104 = vunpack.c.h.bf16 %v1091
        %v1105 = vunpack.c.l.bf16 %v1092
        %v1106 = vunpack.c.h.bf16 %v1092
        %v1107 = vunpack.c.l.bf16 %v1093
        %v1108 = vunpack.c.h.bf16 %v1093
        %v1109 = vunpack.c.l.bf16 %v1094
        %v1110 = vunpack.c.h.bf16 %v1094
        %v1111 = vadd.f32 %v1095, 0.5
        %v1112 = vadd.f32 %v1096, 0.5
        %v1113 = vadd.f32 %v1097, 0.5
        %v1114 = vadd.f32 %v1098, 0.5
        %v1115 = vadd.f32 %v1099, 0.5
        %v1116 = vadd.f32 %v1100, 0.5
        %v1117 = vadd.f32 %v1101, 0.5
        %v1118 = vadd.f32 %v1102, 0.5
        %v1119 = vadd.f32 %v1103, 0.5
        %v1120 = vadd.f32 %v1104, 0.5
        %v1121 = vadd.f32 %v1105, 0.5
        %v1122 = vadd.f32 %v1106, 0.5
        %v1123 = vadd.f32 %v1107, 0.5
        %v1124 = vadd.f32 %v1108, 0.5
        %v1125 = vadd.f32 %v1109, 0.5
        %v1126 = vadd.f32 %v1110, 0.5
        %v1127 = vpack.c.bf16 %v1112, %v1111
        %v1128 = vpack.c.bf16 %v1114, %v1113
        %v1129 = vpack.c.bf16 %v1116, %v1115
        %v1130 = vpack.c.bf16 %v1118, %v1117
        %v1131 = vpack.c.bf16 %v1120, %v1119
        %v1132 = vpack.c.bf16 %v1122, %v1121
        %v1133 = vpack.c.bf16 %v1124, %v1123
        %v1134 = vpack.c.bf16 %v1126, %v1125
        %v1135 = vunpack.c.l.bf16 %v1127
        %v1136 = vunpack.c.h.bf16 %v1127
        %v1137 = vunpack.c.l.bf16 %v1128
        %v1138 = vunpack.c.h.bf16 %v1128
        %v1139 = vunpack.c.l.bf16 %v1129
        %v1140 = vunpack.c.h.bf16 %v1129
        %v1141 = vunpack.c.l.bf16 %v1130
        %v1142 = vunpack.c.h.bf16 %v1130
        %v1143 = vunpack.c.l.bf16 %v1131
        %v1144 = vunpack.c.h.bf16 %v1131
        %v1145 = vunpack.c.l.bf16 %v1132
        %v1146 = vunpack.c.h.bf16 %v1132
        %v1147 = vunpack.c.l.bf16 %v1133
        %v1148 = vunpack.c.h.bf16 %v1133
        %v1149 = vunpack.c.l.bf16 %v1134
        %v1150 = vunpack.c.h.bf16 %v1134
        %v1151 = vmul.f32 %v975, %v1135
        %v1152 = vmul.f32 %v976, %v1136
        %v1153 = vmul.f32 %v977, %v1137
        %v1154 = vmul.f32 %v978, %v1138
        %v1155 = vmul.f32 %v979, %v1139
        %v1156 = vmul.f32 %v980, %v1140
        %v1157 = vmul.f32 %v981, %v1141
        %v1158 = vmul.f32 %v982, %v1142
        %v1159 = vmul.f32 %v983, %v1143
        %v1160 = vmul.f32 %v984, %v1144
        %v1161 = vmul.f32 %v985, %v1145
        %v1162 = vmul.f32 %v986, %v1146
        %v1163 = vmul.f32 %v987, %v1147
        %v1164 = vmul.f32 %v988, %v1148
        %v1165 = vmul.f32 %v989, %v1149
        %v1166 = vmul.f32 %v990, %v1150
        %v1167 = vpack.c.bf16 %v1153, %v1151
        %v1168 = vpack.c.bf16 %v1154, %v1152
        %v1169 = vpack.c.bf16 %v1157, %v1155
        %v1170 = vpack.c.bf16 %v1158, %v1156
        %v1171 = vpack.c.bf16 %v1161, %v1159
        %v1172 = vpack.c.bf16 %v1162, %v1160
        %v1173 = vpack.c.bf16 %v1165, %v1163
        %v1174 = vpack.c.bf16 %v1166, %v1164
        %v1175 = vld [vmem:[%s3] sm:$0xf]
        %v1176 = vld [vmem:[%s3 + $0x4] sm:$0xf]
        %v1177 = vld [vmem:[%s3 + $0x8] sm:$0xf]
        %v1178 = vld [vmem:[%s3 + $0xc] sm:$0xf]
        %v1179 = vld [vmem:[%s3 + $0x10] sm:$0xf]
        %v1180 = vld [vmem:[%s3 + $0x14] sm:$0xf]
        %v1181 = vld [vmem:[%s3 + $0x18] sm:$0xf]
        %v1182 = vld [vmem:[%s3 + $0x1c] sm:$0xf]
        %v1183 = vld [vmem:[%s3 + $0x20] sm:$0xf]
        %v1193 = vunpack.c.l.b16 %v1175
        %v1194 = vunpack.c.l.b16 %v1176
        %v1195 = vunpack.c.l.b16 %v1177
        %v1196 = vunpack.c.l.b16 %v1178
        %v1197 = vunpack.c.l.b16 %v1179
        %v1198 = vunpack.c.l.b16 %v1180
        %v1199 = vunpack.c.l.b16 %v1181
        %v1200 = vunpack.c.l.b16 %v1182
        %v1201 = vunpack.c.l.b16 %v1183
        %v1202 = vpack.c.b16 %v1194, %v1193
        %v1203 = vpack.c.b16 %v1196, %v1195
        %v1204 = vpack.c.b16 %v1198, %v1197
        %v1205 = vpack.c.b16 %v1200, %v1199
        %v1206 = vpack.c.b16 %v1201, %v1201
        %v1208 = vsel %vm397, %v1202, 0
        %v1211 = vsel %vm397, %v1203, 0
        %v1214 = vsel %vm397, %v1204, 0
        %v1217 = vsel %vm397, %v1205, 0
        %v1220 = vsel %vm397, %v1206, 0
        %1222 = vmatpush.bf16.msra.mxu0 0
        %1223 = vmatpush.bf16.msra.mxu0 0
        %1224 = vmatpush.bf16.msra.mxu0 0
        %1225 = vmatpush.bf16.msra.mxu0 0
        %1226 = vmatpush.bf16.msra.mxu0 %v1173
        %1227 = vmatpush.bf16.msra.mxu0 %v1171
        %1228 = vmatpush.bf16.msra.mxu0 %v1169
        %1229 = vmatpush.bf16.msra.mxu0 %v1167
        %1230 = vmatmul.bf16.gmra.mxu0 %v1208
        %v1231 = vpop.f32.mrf.mxu0
        %v1232 = vadd.f32 0.0, %v1231
        %v1233 = vpop.f32.mrf.mxu0
        %v1234 = vadd.f32 0.0, %v1233
        %1235 = vmatmul.bf16.gmra.mxu0 %v1211
        %v1236 = vpop.f32.mrf.mxu0
        %v1237 = vadd.f32 0.0, %v1236
        %v1238 = vpop.f32.mrf.mxu0
        %v1239 = vadd.f32 0.0, %v1238
        %1240 = vmatmul.bf16.gmra.mxu0 %v1214
        %v1241 = vpop.f32.mrf.mxu0
        %v1242 = vadd.f32 0.0, %v1241
        %v1243 = vpop.f32.mrf.mxu0
        %v1244 = vadd.f32 0.0, %v1243
        %1245 = vmatmul.bf16.gmra.mxu0 %v1217
        %v1246 = vpop.f32.mrf.mxu0
        %v1247 = vadd.f32 0.0, %v1246
        %v1248 = vpop.f32.mrf.mxu0
        %v1249 = vadd.f32 0.0, %v1248
        %1250 = vmatmul.bf16.gmra.mxu0 %v1220
        %v1251 = vpop.f32.mrf.mxu0
        %v1252 = vadd.f32 0.0, %v1251
        %v1253 = vpop.f32.mrf.mxu0
        %1254 = vdwg.mxu0
        %1255 = vmatpush.bf16.msra.mxu0 0
        %1256 = vmatpush.bf16.msra.mxu0 0
        %1257 = vmatpush.bf16.msra.mxu0 0
        %1258 = vmatpush.bf16.msra.mxu0 0
        %1259 = vmatpush.bf16.msra.mxu0 %v1174
        %1260 = vmatpush.bf16.msra.mxu0 %v1172
        %1261 = vmatpush.bf16.msra.mxu0 %v1170
        %1262 = vmatpush.bf16.msra.mxu0 %v1168
        %1263 = vmatmul.bf16.gmra.mxu0 %v1208
        %v1264 = vpop.f32.mrf.mxu0
        %v1265 = vadd.f32 0.0, %v1264
        %v1266 = vpop.f32.mrf.mxu0
        %v1267 = vadd.f32 0.0, %v1266
        %1268 = vmatmul.bf16.gmra.mxu0 %v1211
        %v1269 = vpop.f32.mrf.mxu0
        %v1270 = vadd.f32 0.0, %v1269
        %v1271 = vpop.f32.mrf.mxu0
        %v1272 = vadd.f32 0.0, %v1271
        %1273 = vmatmul.bf16.gmra.mxu0 %v1214
        %v1274 = vpop.f32.mrf.mxu0
        %v1275 = vadd.f32 0.0, %v1274
        %v1276 = vpop.f32.mrf.mxu0
        %v1277 = vadd.f32 0.0, %v1276
        %1278 = vmatmul.bf16.gmra.mxu0 %v1217
        %v1279 = vpop.f32.mrf.mxu0
        %v1280 = vadd.f32 0.0, %v1279
        %v1281 = vpop.f32.mrf.mxu0
        %v1282 = vadd.f32 0.0, %v1281
        %1283 = vmatmul.bf16.gmra.mxu0 %v1220
        %v1284 = vpop.f32.mrf.mxu0
        %v1285 = vadd.f32 0.0, %v1284
        %v1286 = vpop.f32.mrf.mxu0
        %1287 = vdwg.mxu0
        %v1288 = vld [vmem:[%s4] sm:$0xff]
        %1290 = vset.pattern.permute.xlu0 0
        %1291 = vperm.xlu0 %1290, %v1288
        %v1292 = vpop.permute.xlu0 %1291
        %v1294 = vadd.f32 %v1242, %v1292
        %v1295 = vadd.f32 %v1275, %v1292
        %1296 = vrot.lane.b32.xlu0 %v1232, 17
        %v1297 = vpop.permute.xlu0 %1296
        %1298 = vrot.lane.b32.xlu0 %v1265, 17
        %v1299 = vpop.permute.xlu0 %1298
        %v1300 = vlaneseq
        %v1301 = vand.u32 %v1300, 127
        %vm1302 = vcmp.lt.s32.totalorder %v1301, 17
        %v1303 = vsel %vm1302, %v1297, %v1299
        %v1304 = vsel %vm1302, %v1299, %v1297
        %v1305 = vld [vmem:[%s6] ss:$8 sm:$0x3]
        %v1307 = vperm.slane %v1305, 0
        %v1308 = vperm.slane %v1305, 1
        %v1311 = vmul.f32 %v1304, %v1307
        %v1312 = vmul.f32 %v1303, %v1308
        %v1313 = vadd.f32 %v1294, %v1311
        %v1314 = vadd.f32 %v1295, %v1312
        %1315 = vrot.lane.b32.xlu0 %v1234, 16
        %v1316 = vpop.permute.xlu0 %1315
        %1317 = vrot.lane.b32.xlu0 %v1267, 16
        %v1318 = vpop.permute.xlu0 %1317
        %vm1319 = vcmp.lt.s32.totalorder %v1301, 16
        %v1320 = vsel %vm1319, %v1316, %v1318
        %v1321 = vsel %vm1319, %v1318, %v1316
        %s1322 = scalar_lea.vmem %s6, 1
        %v1323 = vld [vmem:[%s1322] ss:$8 sm:$0x3]
        %v1325 = vperm.slane %v1323, 0
        %v1326 = vperm.slane %v1323, 1
        %v1329 = vmul.f32 %v1321, %v1325
        %v1330 = vmul.f32 %v1320, %v1326
        %v1331 = vadd.f32 %v1313, %v1329
        %v1332 = vadd.f32 %v1314, %v1330
        %1333 = vrot.lane.b32.xlu0 %v1237, 15
        %v1334 = vpop.permute.xlu0 %1333
        %1335 = vrot.lane.b32.xlu0 %v1270, 15
        %v1336 = vpop.permute.xlu0 %1335
        %vm1337 = vcmp.lt.s32.totalorder %v1301, 15
        %v1338 = vsel %vm1337, %v1334, %v1336
        %v1339 = vsel %vm1337, %v1336, %v1334
        %s1340 = scalar_lea.vmem %s6, 2
        %v1341 = vld [vmem:[%s1340] ss:$8 sm:$0x3]
        %v1343 = vperm.slane %v1341, 0
        %v1344 = vperm.slane %v1341, 1
        %v1347 = vmul.f32 %v1339, %v1343
        %v1348 = vmul.f32 %v1338, %v1344
        %v1349 = vadd.f32 %v1331, %v1347
        %v1350 = vadd.f32 %v1332, %v1348
        %1351 = vrot.lane.b32.xlu0 %v1239, 1
        %v1352 = vpop.permute.xlu0 %1351
        %1353 = vrot.lane.b32.xlu0 %v1272, 1
        %v1354 = vpop.permute.xlu0 %1353
        %vm1355 = vcmp.lt.s32.totalorder %v1301, 1
        %v1356 = vsel %vm1355, %v1352, %v1354
        %v1357 = vsel %vm1355, %v1354, %v1352
        %s1358 = scalar_lea.vmem %s6, 3
        %v1359 = vld [vmem:[%s1358] ss:$8 sm:$0x3]
        %v1361 = vperm.slane %v1359, 0
        %v1362 = vperm.slane %v1359, 1
        %v1365 = vmul.f32 %v1357, %v1361
        %v1366 = vmul.f32 %v1356, %v1362
        %v1367 = vadd.f32 %v1349, %v1365
        %v1368 = vadd.f32 %v1350, %v1366
        %1369 = vrot.lane.b32.xlu0 %v1244, 127
        %v1370 = vpop.permute.xlu0 %1369
        %1371 = vrot.lane.b32.xlu0 %v1277, 127
        %v1372 = vpop.permute.xlu0 %1371
        %vm1373 = vcmp.lt.s32.totalorder %v1301, 127
        %v1374 = vsel %vm1373, %v1370, %v1372
        %v1375 = vsel %vm1373, %v1372, %v1370
        %s1376 = scalar_lea.vmem %s6, 4
        %v1377 = vld [vmem:[%s1376] ss:$8 sm:$0x3]
        %v1379 = vperm.slane %v1377, 0
        %v1380 = vperm.slane %v1377, 1
        %v1383 = vmul.f32 %v1374, %v1379
        %v1384 = vmul.f32 %v1375, %v1380
        %v1385 = vadd.f32 %v1367, %v1383
        %v1386 = vadd.f32 %v1368, %v1384
        %1387 = vrot.lane.b32.xlu0 %v1247, 113
        %v1388 = vpop.permute.xlu0 %1387
        %1389 = vrot.lane.b32.xlu0 %v1280, 113
        %v1390 = vpop.permute.xlu0 %1389
        %vm1391 = vcmp.lt.s32.totalorder %v1301, 113
        %v1392 = vsel %vm1391, %v1388, %v1390
        %v1393 = vsel %vm1391, %v1390, %v1388
        %s1394 = scalar_lea.vmem %s6, 5
        %v1395 = vld [vmem:[%s1394] ss:$8 sm:$0x3]
        %v1397 = vperm.slane %v1395, 0
        %v1398 = vperm.slane %v1395, 1
        %v1401 = vmul.f32 %v1392, %v1397
        %v1402 = vmul.f32 %v1393, %v1398
        %v1403 = vadd.f32 %v1385, %v1401
        %v1404 = vadd.f32 %v1386, %v1402
        %1405 = vrot.lane.b32.xlu0 %v1249, 112
        %v1406 = vpop.permute.xlu0 %1405
        %1407 = vrot.lane.b32.xlu0 %v1282, 112
        %v1408 = vpop.permute.xlu0 %1407
        %vm1409 = vcmp.lt.s32.totalorder %v1301, 112
        %v1410 = vsel %vm1409, %v1406, %v1408
        %v1411 = vsel %vm1409, %v1408, %v1406
        %s1412 = scalar_lea.vmem %s6, 6
        %v1413 = vld [vmem:[%s1412] ss:$8 sm:$0x3]
        %v1415 = vperm.slane %v1413, 0
        %v1416 = vperm.slane %v1413, 1
        %v1419 = vmul.f32 %v1410, %v1415
        %v1420 = vmul.f32 %v1411, %v1416
        %v1421 = vadd.f32 %v1403, %v1419
        %v1422 = vadd.f32 %v1404, %v1420
        %1423 = vrot.lane.b32.xlu0 %v1252, 111
        %v1424 = vpop.permute.xlu0 %1423
        %1425 = vrot.lane.b32.xlu0 %v1285, 111
        %v1426 = vpop.permute.xlu0 %1425
        %vm1427 = vcmp.lt.s32.totalorder %v1301, 111
        %v1428 = vsel %vm1427, %v1424, %v1426
        %v1429 = vsel %vm1427, %v1426, %v1424
        %s1430 = scalar_lea.vmem %s6, 7
        %v1431 = vld [vmem:[%s1430] ss:$8 sm:$0x3]
        %v1433 = vperm.slane %v1431, 0
        %v1434 = vperm.slane %v1431, 1
        %v1437 = vmul.f32 %v1428, %v1433
        %v1438 = vmul.f32 %v1429, %v1434
        %v1439 = vadd.f32 %v1421, %v1437
        %v1440 = vadd.f32 %v1422, %v1438
        %1441 = vst [vmem:[%s298] sm:$0xff] %v1439
        %1442 = vst [vmem:[%s298 + $0x8] sm:$0xff] %v1440
        %s1443 = sand.u32 %s184, 1
        %s1444 = scalar_lea.sflag [#allocation4], %s1443
        %s1445 = sand.u32 %s184, 1
        %s1446 = smul.addr %s1445, 16
        %s1447 = scalar_lea.vmem [#allocation5], %s1446
        // Predicated region
        $region53: #{tpu_custom_call.1} parent=47 // pred_check
          %p1448 = pneg %p194
        $region54: #{tpu_custom_call.1} parent=47 // pred_check_branch
          %1450 = sbr.rel (%p1448) target = $region56
        $region55: #{tpu_custom_call.1} parent=47 // pred_region
          %1452 = vsyncadd %s1444, 0
          %s1453 = smul.addr %s24, 2
          %s1454 = smul.addr %s1453, 8
          %s1455 = scalar_lea.hbm %s7, %s1454
          %s1457 = sshll.u32 %s1447, 4
          %s1458 = int_to_ptr.vmem [resolvable:$true] %s1457
          %s1459 = sshll.u32 %s1455, 4
          %s1460 = int_to_ptr.hbm [resolvable:$true] %s1459
          %1462 = dma.vmem_to_hbm [thread:$0]  %s1458, 256, %s1460, %s1444
        $region56: #{tpu_custom_call.1} parent=47 // pred_fallthru
          _
      $region48: #{tpu_custom_call.1} parent=5 // pred_fallthru
        _
      %p1463 = scmp.le.s32.totalorder 2, %s19
      // Predicated region
      $region57: #{tpu_custom_call.1} parent=5 // pred_check
        %p1464 = pneg %p1463
      $region58: #{tpu_custom_call.1} parent=5 // pred_check_branch
        %1466 = sbr.rel (%p1464) target = $region60
      $region59: #{tpu_custom_call.1} parent=5 // pred_region
        %s1467 = ssub.s32 %s19, 2
        // Predicated region
        $region61: #{tpu_custom_call.1} parent=59 // pred_check
          %p1468 = pneg %p200
        $region62: #{tpu_custom_call.1} parent=59 // pred_check_branch
          %1470 = sbr.rel (%p1468) target = $region64
        $region63: #{tpu_custom_call.1} parent=59 // pred_region
          %s1471 = sand.u32 %s185, 1
          %s1472 = scalar_lea.sflag [#allocation4], %s1471
          %s1473 = sand.u32 %s185, 1
          %s1474 = smul.addr %s1473, 16
          %s1475 = scalar_lea.vmem [#allocation5], %s1474
          %1477 = dma.done %s1472, 256
        $region64: #{tpu_custom_call.1} parent=59 // pred_fallthru
          _
      $region60: #{tpu_custom_call.1} parent=5 // pred_fallthru
        _
    $region6: #{tpu_custom_call.1} parent=1 // loop_footer
      %s23 = sadd.s32 1, %s19
    $region7: #{tpu_custom_call.1} parent=1 // loop_footer_branch
      %18 = sbr.rel target = $region3
    $region8: #{tpu_custom_call.1} parent=1 // loop_exit
      _
    %1478 = vsyncpa [#allocation3], 1
    %s1479 = scalar_lea.sflag [#allocation3], 1
    %1480 = vsyncpa %s1479, 1
    %1481 = vsyncpa [#allocation4], 1
    %s1482 = scalar_lea.sflag [#allocation4], 1
    %1483 = vsyncpa %s1482, 1

</llo_original>
